<compile_context>
chip_gen: v6e
topology: v6e:2x2x1
jax: 0.10.0
libtpu: 0.0.40
codegen_flags: <defaults>
</compile_context>

<pallas_src>
import jax
import jax.numpy as jnp
import numpy as np
from jax import lax
from jax.experimental import pallas as pl
from jax.experimental.pallas import tpu as pltpu


def _round_up(x, m):
    return ((x + m - 1) // m) * m


def _fold_bn(gamma, beta, mean, var, eps=1e-5):
    scale = gamma * lax.rsqrt(var + eps)
    bias = beta - mean * scale
    return scale, bias


@jax.jit
def down_pallas(x_nchw, params):
    """x_nchw: (N, Cin, H, W) float32.  Returns (N, Cout, H//2, W//2)."""
    w1, g1, be1, m1, v1, w2, g2, be2, m2, v2 = params
    N, Cin, H, W = x_nchw.shape
    # PyTorch MaxPool2d(2) floors odd spatial dims -> crop to even.
    He, We = (H // 2) * 2, (W // 2) * 2
    Hp, Wp = He // 2, We // 2
    Cout = w1.shape[-1]
    Coutp = _round_up(Cout, 128)          # lane-dense output channels
    C2p = _round_up(2 * Cin, 128)         # folded (w-parity, channel) lane dim

    # ---- spatial row tiling: TH pooled output rows per grid step ----
    # TH*Wp is the matmul M; larger TH keeps the 256-wide MXU (v6e/v7x) full.
    TH = min(Hp, 32)
    n_tiles = -(-Hp // TH)
    Hpad = n_tiles * TH

    # ---- fold BN (inference mode); zero-pad folded scale/bias to Coutp ----
    s1, b1 = _fold_bn(g1, be1, m1, v1)
    s2, b2 = _fold_bn(g2, be2, m2, v2)
    s1 = jnp.pad(s1, (0, Coutp - Cout)).reshape(1, 1, Coutp)
    b1 = jnp.pad(b1, (0, Coutp - Cout)).reshape(1, 1, Coutp)
    s2 = jnp.pad(s2, (0, Coutp - Cout)).reshape(1, 1, Coutp)
    b2 = jnp.pad(b2, (0, Coutp - Cout)).reshape(1, 1, Coutp)

    # ---- weights: (3,3,I,O) -> bf16, dy-grouped layout (3, 3*I, Op) ----
    w1p = jnp.pad(w1, ((0, 0), (0, 0), (0, 0), (0, Coutp - Cout)))
    w1p = w1p.reshape(3, 3 * Cin, Coutp).astype(jnp.bfloat16)
    w2p = jnp.pad(w2, ((0, 0), (0, 0), (0, Coutp - Cout), (0, Coutp - Cout)))
    w2p = w2p.reshape(3, 3 * Coutp, Coutp).astype(jnp.bfloat16)

    # ---- activations: NCHW -> NHWC, bf16, pool-fold, halo row tiles ----
    x = jnp.transpose(x_nchw[:, :, :He, :We], (0, 2, 3, 1)).astype(jnp.bfloat16)
    # rows: 2 pooled halo rows (4 px) top, 4 + 2*(Hpad-Hp) px bottom;
    # cols: 1 pooled col (2 px) each side == conv1's SAME zero pad after pool.
    x = jnp.pad(x, ((0, 0), (4, 4 + 2 * (Hpad - Hp)), (2, 2), (0, 0)))
    # fold the 2x2 window's w-parity next to the channel dim (lane dense).
    x = x.reshape(N, 2 * (Hpad + 4), Wp + 2, 2 * Cin)
    x = jnp.pad(x, ((0, 0), (0, 0), (0, 0), (0, C2p - 2 * Cin)))
    # gather each tile's 2*(TH+4) raw rows (TH pooled rows + 2-row halo/side).
    idx = (np.arange(n_tiles, dtype=np.int32)[:, None] * (2 * TH)
           + np.arange(2 * (TH + 4), dtype=np.int32)[None, :])
    x = jnp.take(x, jnp.asarray(idx), axis=1)  # (N, n_tiles, 2(TH+4), Wp+2, C2p)

    out_dtype = x_nchw.dtype

    def kernel(x_ref, w1_ref, s1_ref, b1_ref, w2_ref, s2_ref, b2_ref, o_ref):
        t = pl.program_id(1)

        # -- MaxPool2d(2): two full-tile VPU maxima (h-parity then w-parity) --
        xb = x_ref[...].reshape(TH + 4, 2, Wp + 2, C2p)
        m = jnp.maximum(xb[:, 0], xb[:, 1])                       # h-parity
        pooled = jnp.maximum(m[..., :Cin], m[..., Cin:2 * Cin])   # w-parity

        # -- 3x3 conv = 3 dy-grouped accumulating MXU matmuls (bf16 -> f32) --
        def conv3x3(src, w_ref, rows):
            acc = None
            for g in range(3):
                patch = jnp.concatenate(
                    [src[g:g + rows, dx:dx + Wp, :] for dx in range(3)],
                    axis=-1)
                y = lax.dot_general(
                    patch, w_ref[g],
                    dimension_numbers=(((2,), (0,)), ((), ())),
                    preferred_element_type=jnp.float32)
                acc = y if acc is None else acc + y
            return acc

        # conv1 + BN1 + ReLU over TH+2 rows (1-row halo each side for conv2).
        y1 = conv3x3(pooled, w1_ref, TH + 2)
        y1 = jnp.maximum(y1 * s1_ref[...] + b1_ref[...], 0.0)

        # conv2's SAME zero padding: halo rows outside the image are zeroed in
        # registers; zero columns are concatenated in registers -> no padded
        # scratch, no masked width-1 stores.
        row = (t * TH - 1) + lax.broadcasted_iota(jnp.int32, (TH + 2, 1, 1), 0)
        y1 = jnp.where((row >= 0) & (row < Hp), y1, 0.0).astype(jnp.bfloat16)
        zcol = jnp.zeros((TH + 2, 1, Coutp), jnp.bfloat16)
        y1p = jnp.concatenate([zcol, y1, zcol], axis=1)  # (TH+2, Wp+2, Coutp)

        # conv2 + BN2 + ReLU, lane-dense unmasked store.
        y2 = conv3x3(y1p, w2_ref, TH)
        y2 = jnp.maximum(y2 * s2_ref[...] + b2_ref[...], 0.0)
        o_ref[0] = y2.astype(o_ref.dtype)

    # ---- VMEM budget: block + weight + live-temporary footprint ----
    in_block_b = 2 * (TH + 4) * (Wp + 2) * C2p * 2
    out_block_b = TH * Wp * Coutp * 4
    w_b = (9 * Cin + 9 * Coutp) * Coutp * 2 + 4 * Coutp * 4
    tmp_b = ((TH + 4) * (Wp + 2) * (C2p + Cin) * 2            # m + pooled
             + (TH + 2) * Wp * (3 * Cin * 2 + 8 * Coutp)      # patches1 + y1
             + (TH + 2) * (Wp + 2) * Coutp * 2                 # y1p
             + TH * Wp * (3 * Coutp * 2 + 4 * Coutp))          # patches2 + acc2
    est = 2 * (in_block_b + out_block_b) + w_b + 2 * tmp_b
    try:
        vmem_cap = pltpu.get_tpu_info().vmem_capacity_bytes
    except Exception:  # pragma: no cover - conservative fallback
        vmem_cap = 64 << 20
    vmem_limit = int(min(max(est + (8 << 20), 32 << 20), vmem_cap - (16 << 20)))

    out_nhwc = pl.pallas_call(
        kernel,
        out_shape=jax.ShapeDtypeStruct((N, Hpad, Wp, Coutp), out_dtype),
        grid_spec=pltpu.PrefetchScalarGridSpec(
            num_scalar_prefetch=0,
            grid=(N, n_tiles),
            in_specs=[
                # TODO(synk): add pipeline_mode=pl.Buffered(3) here if xprof
                # still shows exposed input DMA once compute-bound.
                pl.BlockSpec((1, 1, 2 * (TH + 4), Wp + 2, C2p),
                             lambda n, t: (n, t, 0, 0, 0)),
                pl.BlockSpec((3, 3 * Cin, Coutp), lambda n, t: (0, 0, 0)),
                pl.BlockSpec((1, 1, Coutp), lambda n, t: (0, 0, 0)),
                pl.BlockSpec((1, 1, Coutp), lambda n, t: (0, 0, 0)),
                pl.BlockSpec((3, 3 * Coutp, Coutp), lambda n, t: (0, 0, 0)),
                pl.BlockSpec((1, 1, Coutp), lambda n, t: (0, 0, 0)),
                pl.BlockSpec((1, 1, Coutp), lambda n, t: (0, 0, 0)),
            ],
            out_specs=pl.BlockSpec((1, TH, Wp, Coutp),
                                   lambda n, t: (n, t, 0, 0)),
        ),
        compiler_params=pltpu.CompilerParams(
            dimension_semantics=("parallel", "parallel"),
            vmem_limit_bytes=vmem_limit),
    )(x, w1p, s1, b1, w2p, s2, b2)

    # Drop row/channel padding, NHWC -> NCHW.
    return jnp.transpose(out_nhwc[:, :Hp, :, :Cout], (0, 3, 1, 2))


def _reference_down(x_nchw, params):
    """Pure-JAX f32 reference of the PyTorch forward (inference-mode BN)."""
    w1, g1, be1, m1, v1, w2, g2, be2, m2, v2 = params
    x = jnp.transpose(x_nchw, (0, 2, 3, 1))  # NHWC
    pooled = lax.reduce_window(x, -jnp.inf, lax.max,
                               (1, 2, 2, 1), (1, 2, 2, 1), 'VALID')

    def conv_bn_relu(y, w, g, be, m, v):
        c = lax.conv_general_dilated(
            y, w, window_strides=(1, 1), padding='SAME',
            dimension_numbers=('NHWC', 'HWIO', 'NHWC'))
        s, b = _fold_bn(g, be, m, v)
        return jnp.maximum(c * s + b, 0.0)

    y = conv_bn_relu(pooled, w1, g1, be1, m1, v1)
    y = conv_bn_relu(y, w2, g2, be2, m2, v2)
    return jnp.transpose(y, (0, 3, 1, 2))  # NCHW


def _init_params(key, cin, cout):
    ks = jax.random.split(key, 10)
    w1 = 0.1 * jax.random.normal(ks[0], (3, 3, cin, cout), jnp.float32)
    g1 = 1.0 + 0.1 * jax.random.normal(ks[1], (cout,), jnp.float32)
    be1 = 0.05 * jax.random.normal(ks[2], (cout,), jnp.float32)
    m1 = 0.1 * jax.random.normal(ks[3], (cout,), jnp.float32)
    v1 = jax.random.uniform(ks[4], (cout,), jnp.float32, 0.5, 1.5)
    w2 = 0.1 * jax.random.normal(ks[5], (3, 3, cout, cout), jnp.float32)
    g2 = 1.0 + 0.1 * jax.random.normal(ks[6], (cout,), jnp.float32)
    be2 = 0.05 * jax.random.normal(ks[7], (cout,), jnp.float32)
    m2 = 0.1 * jax.random.normal(ks[8], (cout,), jnp.float32)
    v2 = jax.random.uniform(ks[9], (cout,), jnp.float32, 0.5, 1.5)
    return (w1, g1, be1, m1, v1, w2, g2, be2, m2, v2)


if __name__ == "__main__":
    key = jax.random.PRNGKey(0)
    k_x, k_p = jax.random.split(key)

    N, Cin, H, W = 2, 4, 16, 16
    Cout = 8

    x = jax.random.normal(k_x, (N, Cin, H, W), jnp.float32)
    params = _init_params(k_p, Cin, Cout)

    out = jax.block_until_ready(down_pallas(x, params))
    ref = jax.block_until_ready(_reference_down(x, params))

    assert out.shape == (N, Cout, H // 2, W // 2), out.shape
    # bf16 MXU operands (f32 accumulation) vs. the f32 reference -> ~1e-3
    # relative error; 2e-2 tolerance has ample margin.
    np.testing.assert_allclose(np.asarray(out), np.asarray(ref),
                               rtol=2e-2, atol=2e-2)
    print("KERNEL_OK")
</pallas_src>

<mosaic_0001>
module attributes {stable_mosaic.version = 11 : i64} {
  func.func @kernel(%arg0: i32, %arg1: i32, %arg2: memref<1x1x24x10x128xbf16, #tpu.memory_space<vmem>>, %arg3: memref<3x12x128xbf16, #tpu.memory_space<vmem>>, %arg4: memref<1x1x128xf32, #tpu.memory_space<vmem>>, %arg5: memref<1x1x128xf32, #tpu.memory_space<vmem>>, %arg6: memref<3x384x128xbf16, #tpu.memory_space<vmem>>, %arg7: memref<1x1x128xf32, #tpu.memory_space<vmem>>, %arg8: memref<1x1x128xf32, #tpu.memory_space<vmem>>, %arg9: memref<1x8x8x128xf32, #tpu.memory_space<vmem>>) attributes {dimension_semantics = [#tpu.dimension_semantics<parallel>, #tpu.dimension_semantics<parallel>], iteration_bounds = array<i64: 2, 1>, scalar_prefetch = 0 : i64, scratch_operands = 0 : i64, tpu.core_type = #tpu.core_type<tc>, window_params = [{transform_indices = @transform_0, window_bounds = array<i64: 1, 1, 24, 10, 128>}, {pipeline_mode = #tpu.pipeline_mode<synchronous>, transform_indices = @transform_1, window_bounds = array<i64: 3, 12, 128>}, {pipeline_mode = #tpu.pipeline_mode<synchronous>, transform_indices = @transform_2, window_bounds = array<i64: 1, 1, 128>}, {pipeline_mode = #tpu.pipeline_mode<synchronous>, transform_indices = @transform_3, window_bounds = array<i64: 1, 1, 128>}, {pipeline_mode = #tpu.pipeline_mode<synchronous>, transform_indices = @transform_4, window_bounds = array<i64: 3, 384, 128>}, {pipeline_mode = #tpu.pipeline_mode<synchronous>, transform_indices = @transform_5, window_bounds = array<i64: 1, 1, 128>}, {pipeline_mode = #tpu.pipeline_mode<synchronous>, transform_indices = @transform_6, window_bounds = array<i64: 1, 1, 128>}, {transform_indices = @transform_7, window_bounds = array<i64: 1, 8, 8, 128>}]} {
    %c0 = arith.constant 0 : index
    %c0_0 = arith.constant 0 : index
    %c0_1 = arith.constant 0 : index
    %c0_2 = arith.constant 0 : index
    %c0_3 = arith.constant 0 : index
    %0 = vector.load %arg2[%c0, %c0_0, %c0_1, %c0_2, %c0_3] : memref<1x1x24x10x128xbf16, #tpu.memory_space<vmem>>, vector<1x1x24x10x128xbf16>
    %1 = vector.shape_cast %0 : vector<1x1x24x10x128xbf16> to vector<12x2x10x128xbf16>
    %2 = vector.extract_strided_slice %1 {offsets = [0, 0, 0, 0], sizes = [12, 1, 10, 128], strides = [1, 1, 1, 1]} : vector<12x2x10x128xbf16> to vector<12x1x10x128xbf16>
    %3 = vector.shape_cast %2 : vector<12x1x10x128xbf16> to vector<12x10x128xbf16>
    %4 = vector.extract_strided_slice %1 {offsets = [0, 1, 0, 0], sizes = [12, 1, 10, 128], strides = [1, 1, 1, 1]} : vector<12x2x10x128xbf16> to vector<12x1x10x128xbf16>
    %5 = vector.shape_cast %4 : vector<12x1x10x128xbf16> to vector<12x10x128xbf16>
    %6 = arith.maximumf %3, %5 : vector<12x10x128xbf16>
    %7 = vector.extract_strided_slice %6 {offsets = [0, 0, 0], sizes = [12, 10, 4], strides = [1, 1, 1]} : vector<12x10x128xbf16> to vector<12x10x4xbf16>
    %8 = vector.extract_strided_slice %6 {offsets = [0, 0, 4], sizes = [12, 10, 4], strides = [1, 1, 1]} : vector<12x10x128xbf16> to vector<12x10x4xbf16>
    %9 = arith.maximumf %7, %8 : vector<12x10x4xbf16>
    %10 = vector.extract_strided_slice %9 {offsets = [0, 0, 0], sizes = [10, 8, 4], strides = [1, 1, 1]} : vector<12x10x4xbf16> to vector<10x8x4xbf16>
    %11 = vector.extract_strided_slice %9 {offsets = [0, 1, 0], sizes = [10, 8, 4], strides = [1, 1, 1]} : vector<12x10x4xbf16> to vector<10x8x4xbf16>
    %12 = vector.extract_strided_slice %9 {offsets = [0, 2, 0], sizes = [10, 8, 4], strides = [1, 1, 1]} : vector<12x10x4xbf16> to vector<10x8x4xbf16>
    %13 = tpu.concatenate %10, %11, %12 in 2 : vector<10x8x4xbf16>, vector<10x8x4xbf16>, vector<10x8x4xbf16> -> vector<10x8x12xbf16>
    %c0_4 = arith.constant 0 : index
    %c0_5 = arith.constant 0 : index
    %c0_6 = arith.constant 0 : index
    %14 = vector.load %arg3[%c0_4, %c0_5, %c0_6] : memref<3x12x128xbf16, #tpu.memory_space<vmem>>, vector<1x12x128xbf16>
    %15 = vector.shape_cast %14 : vector<1x12x128xbf16> to vector<12x128xbf16>
    %cst = arith.constant dense<0.000000e+00> : vector<10x8x128xf32>
    %16 = tpu.matmul %13, %15, %cst {dimension_numbers = #tpu.dot_dimension_numbers<[2], [0], [0, 1], [1], [0, 0, 0, 1, 1, 1], [], []>} : vector<10x8x12xbf16>, vector<12x128xbf16>, vector<10x8x128xf32> -> vector<10x8x128xf32>
    %17 = vector.extract_strided_slice %9 {offsets = [1, 0, 0], sizes = [10, 8, 4], strides = [1, 1, 1]} : vector<12x10x4xbf16> to vector<10x8x4xbf16>
    %18 = vector.extract_strided_slice %9 {offsets = [1, 1, 0], sizes = [10, 8, 4], strides = [1, 1, 1]} : vector<12x10x4xbf16> to vector<10x8x4xbf16>
    %19 = vector.extract_strided_slice %9 {offsets = [1, 2, 0], sizes = [10, 8, 4], strides = [1, 1, 1]} : vector<12x10x4xbf16> to vector<10x8x4xbf16>
    %20 = tpu.concatenate %17, %18, %19 in 2 : vector<10x8x4xbf16>, vector<10x8x4xbf16>, vector<10x8x4xbf16> -> vector<10x8x12xbf16>
    %c1 = arith.constant 1 : index
    %c0_7 = arith.constant 0 : index
    %c0_8 = arith.constant 0 : index
    %21 = vector.load %arg3[%c1, %c0_7, %c0_8] : memref<3x12x128xbf16, #tpu.memory_space<vmem>>, vector<1x12x128xbf16>
    %22 = vector.shape_cast %21 : vector<1x12x128xbf16> to vector<12x128xbf16>
    %cst_9 = arith.constant dense<0.000000e+00> : vector<10x8x128xf32>
    %23 = tpu.matmul %20, %22, %cst_9 {dimension_numbers = #tpu.dot_dimension_numbers<[2], [0], [0, 1], [1], [0, 0, 0, 1, 1, 1], [], []>} : vector<10x8x12xbf16>, vector<12x128xbf16>, vector<10x8x128xf32> -> vector<10x8x128xf32>
    %24 = arith.addf %16, %23 : vector<10x8x128xf32>
    %25 = vector.extract_strided_slice %9 {offsets = [2, 0, 0], sizes = [10, 8, 4], strides = [1, 1, 1]} : vector<12x10x4xbf16> to vector<10x8x4xbf16>
    %26 = vector.extract_strided_slice %9 {offsets = [2, 1, 0], sizes = [10, 8, 4], strides = [1, 1, 1]} : vector<12x10x4xbf16> to vector<10x8x4xbf16>
    %27 = vector.extract_strided_slice %9 {offsets = [2, 2, 0], sizes = [10, 8, 4], strides = [1, 1, 1]} : vector<12x10x4xbf16> to vector<10x8x4xbf16>
    %28 = tpu.concatenate %25, %26, %27 in 2 : vector<10x8x4xbf16>, vector<10x8x4xbf16>, vector<10x8x4xbf16> -> vector<10x8x12xbf16>
    %c2 = arith.constant 2 : index
    %c0_10 = arith.constant 0 : index
    %c0_11 = arith.constant 0 : index
    %29 = vector.load %arg3[%c2, %c0_10, %c0_11] : memref<3x12x128xbf16, #tpu.memory_space<vmem>>, vector<1x12x128xbf16>
    %30 = vector.shape_cast %29 : vector<1x12x128xbf16> to vector<12x128xbf16>
    %cst_12 = arith.constant dense<0.000000e+00> : vector<10x8x128xf32>
    %31 = tpu.matmul %28, %30, %cst_12 {dimension_numbers = #tpu.dot_dimension_numbers<[2], [0], [0, 1], [1], [0, 0, 0, 1, 1, 1], [], []>} : vector<10x8x12xbf16>, vector<12x128xbf16>, vector<10x8x128xf32> -> vector<10x8x128xf32>
    %32 = arith.addf %24, %31 : vector<10x8x128xf32>
    %c0_13 = arith.constant 0 : index
    %c0_14 = arith.constant 0 : index
    %c0_15 = arith.constant 0 : index
    %33 = vector.load %arg4[%c0_13, %c0_14, %c0_15] : memref<1x1x128xf32, #tpu.memory_space<vmem>>, vector<1x1x128xf32>
    %34 = vector.broadcast %33 : vector<1x1x128xf32> to vector<10x8x128xf32>
    %35 = arith.mulf %32, %34 : vector<10x8x128xf32>
    %c0_16 = arith.constant 0 : index
    %c0_17 = arith.constant 0 : index
    %c0_18 = arith.constant 0 : index
    %36 = vector.load %arg5[%c0_16, %c0_17, %c0_18] : memref<1x1x128xf32, #tpu.memory_space<vmem>>, vector<1x1x128xf32>
    %37 = vector.broadcast %36 : vector<1x1x128xf32> to vector<10x8x128xf32>
    %38 = arith.addf %35, %37 : vector<10x8x128xf32>
    %cst_19 = arith.constant 0.000000e+00 : f32
    %39 = vector.broadcast %cst_19 : f32 to vector<10x8x128xf32>
    %40 = arith.maximumf %38, %39 : vector<10x8x128xf32>
    %c8_i32 = arith.constant 8 : i32
    %41 = arith.muli %arg1, %c8_i32 : i32
    %c1_i32 = arith.constant 1 : i32
    %42 = arith.subi %41, %c1_i32 : i32
    %43 = tpu.iota {dimensions = array<i32: 0>} : vector<10x1x1xi32>
    %44 = vector.broadcast %42 : i32 to vector<10x1x1xi32>
    %45 = arith.addi %44, %43 : vector<10x1x1xi32>
    %c0_i32 = arith.constant 0 : i32
    %46 = vector.broadcast %c0_i32 : i32 to vector<10x1x1xi32>
    %47 = arith.cmpi sge, %45, %46 : vector<10x1x1xi32>
    %c8_i32_20 = arith.constant 8 : i32
    %48 = vector.broadcast %c8_i32_20 : i32 to vector<10x1x1xi32>
    %49 = arith.cmpi slt, %45, %48 : vector<10x1x1xi32>
    %50 = arith.andi %47, %49 : vector<10x1x1xi1>
    %cst_21 = arith.constant 0.000000e+00 : f32
    %51 = vector.shape_cast %50 : vector<10x1x1xi1> to vector<10x1x1xi1>
    %52 = vector.broadcast %51 : vector<10x1x1xi1> to vector<10x8x128xi1>
    %53 = vector.broadcast %cst_21 : f32 to vector<10x8x128xf32>
    %54 = arith.select %52, %40, %53 : vector<10x8x128xi1>, vector<10x8x128xf32>
    %55 = arith.truncf %54 : vector<10x8x128xf32> to vector<10x8x128xbf16>
    %cst_22 = arith.constant 0.000000e+00 : bf16
    %56 = vector.broadcast %cst_22 : bf16 to vector<10x1x128xbf16>
    %57 = tpu.concatenate %56, %55, %56 in 1 : vector<10x1x128xbf16>, vector<10x8x128xbf16>, vector<10x1x128xbf16> -> vector<10x10x128xbf16>
    %58 = vector.extract_strided_slice %57 {offsets = [0, 0, 0], sizes = [8, 8, 128], strides = [1, 1, 1]} : vector<10x10x128xbf16> to vector<8x8x128xbf16>
    %59 = vector.extract_strided_slice %57 {offsets = [0, 1, 0], sizes = [8, 8, 128], strides = [1, 1, 1]} : vector<10x10x128xbf16> to vector<8x8x128xbf16>
    %60 = vector.extract_strided_slice %57 {offsets = [0, 2, 0], sizes = [8, 8, 128], strides = [1, 1, 1]} : vector<10x10x128xbf16> to vector<8x8x128xbf16>
    %61 = tpu.concatenate %58, %59, %60 in 2 : vector<8x8x128xbf16>, vector<8x8x128xbf16>, vector<8x8x128xbf16> -> vector<8x8x384xbf16>
    %c0_23 = arith.constant 0 : index
    %c0_24 = arith.constant 0 : index
    %c0_25 = arith.constant 0 : index
    %62 = vector.load %arg6[%c0_23, %c0_24, %c0_25] : memref<3x384x128xbf16, #tpu.memory_space<vmem>>, vector<1x384x128xbf16>
    %63 = vector.shape_cast %62 : vector<1x384x128xbf16> to vector<384x128xbf16>
    %cst_26 = arith.constant dense<0.000000e+00> : vector<8x8x128xf32>
    %64 = tpu.matmul %61, %63, %cst_26 {dimension_numbers = #tpu.dot_dimension_numbers<[2], [0], [0, 1], [1], [0, 0, 0, 1, 1, 1], [], []>} : vector<8x8x384xbf16>, vector<384x128xbf16>, vector<8x8x128xf32> -> vector<8x8x128xf32>
    %65 = vector.extract_strided_slice %57 {offsets = [1, 0, 0], sizes = [8, 8, 128], strides = [1, 1, 1]} : vector<10x10x128xbf16> to vector<8x8x128xbf16>
    %66 = vector.extract_strided_slice %57 {offsets = [1, 1, 0], sizes = [8, 8, 128], strides = [1, 1, 1]} : vector<10x10x128xbf16> to vector<8x8x128xbf16>
    %67 = vector.extract_strided_slice %57 {offsets = [1, 2, 0], sizes = [8, 8, 128], strides = [1, 1, 1]} : vector<10x10x128xbf16> to vector<8x8x128xbf16>
    %68 = tpu.concatenate %65, %66, %67 in 2 : vector<8x8x128xbf16>, vector<8x8x128xbf16>, vector<8x8x128xbf16> -> vector<8x8x384xbf16>
    %c1_27 = arith.constant 1 : index
    %c0_28 = arith.constant 0 : index
    %c0_29 = arith.constant 0 : index
    %69 = vector.load %arg6[%c1_27, %c0_28, %c0_29] : memref<3x384x128xbf16, #tpu.memory_space<vmem>>, vector<1x384x128xbf16>
    %70 = vector.shape_cast %69 : vector<1x384x128xbf16> to vector<384x128xbf16>
    %cst_30 = arith.constant dense<0.000000e+00> : vector<8x8x128xf32>
    %71 = tpu.matmul %68, %70, %cst_30 {dimension_numbers = #tpu.dot_dimension_numbers<[2], [0], [0, 1], [1], [0, 0, 0, 1, 1, 1], [], []>} : vector<8x8x384xbf16>, vector<384x128xbf16>, vector<8x8x128xf32> -> vector<8x8x128xf32>
    %72 = arith.addf %64, %71 : vector<8x8x128xf32>
    %73 = vector.extract_strided_slice %57 {offsets = [2, 0, 0], sizes = [8, 8, 128], strides = [1, 1, 1]} : vector<10x10x128xbf16> to vector<8x8x128xbf16>
    %74 = vector.extract_strided_slice %57 {offsets = [2, 1, 0], sizes = [8, 8, 128], strides = [1, 1, 1]} : vector<10x10x128xbf16> to vector<8x8x128xbf16>
    %75 = vector.extract_strided_slice %57 {offsets = [2, 2, 0], sizes = [8, 8, 128], strides = [1, 1, 1]} : vector<10x10x128xbf16> to vector<8x8x128xbf16>
    %76 = tpu.concatenate %73, %74, %75 in 2 : vector<8x8x128xbf16>, vector<8x8x128xbf16>, vector<8x8x128xbf16> -> vector<8x8x384xbf16>
    %c2_31 = arith.constant 2 : index
    %c0_32 = arith.constant 0 : index
    %c0_33 = arith.constant 0 : index
    %77 = vector.load %arg6[%c2_31, %c0_32, %c0_33] : memref<3x384x128xbf16, #tpu.memory_space<vmem>>, vector<1x384x128xbf16>
    %78 = vector.shape_cast %77 : vector<1x384x128xbf16> to vector<384x128xbf16>
    %cst_34 = arith.constant dense<0.000000e+00> : vector<8x8x128xf32>
    %79 = tpu.matmul %76, %78, %cst_34 {dimension_numbers = #tpu.dot_dimension_numbers<[2], [0], [0, 1], [1], [0, 0, 0, 1, 1, 1], [], []>} : vector<8x8x384xbf16>, vector<384x128xbf16>, vector<8x8x128xf32> -> vector<8x8x128xf32>
    %80 = arith.addf %72, %79 : vector<8x8x128xf32>
    %c0_35 = arith.constant 0 : index
    %c0_36 = arith.constant 0 : index
    %c0_37 = arith.constant 0 : index
    %81 = vector.load %arg7[%c0_35, %c0_36, %c0_37] : memref<1x1x128xf32, #tpu.memory_space<vmem>>, vector<1x1x128xf32>
    %82 = vector.broadcast %81 : vector<1x1x128xf32> to vector<8x8x128xf32>
    %83 = arith.mulf %80, %82 : vector<8x8x128xf32>
    %c0_38 = arith.constant 0 : index
    %c0_39 = arith.constant 0 : index
    %c0_40 = arith.constant 0 : index
    %84 = vector.load %arg8[%c0_38, %c0_39, %c0_40] : memref<1x1x128xf32, #tpu.memory_space<vmem>>, vector<1x1x128xf32>
    %85 = vector.broadcast %84 : vector<1x1x128xf32> to vector<8x8x128xf32>
    %86 = arith.addf %83, %85 : vector<8x8x128xf32>
    %cst_41 = arith.constant 0.000000e+00 : f32
    %87 = vector.broadcast %cst_41 : f32 to vector<8x8x128xf32>
    %88 = arith.maximumf %86, %87 : vector<8x8x128xf32>
    %c0_42 = arith.constant 0 : index
    %c0_43 = arith.constant 0 : index
    %c0_44 = arith.constant 0 : index
    %c0_45 = arith.constant 0 : index
    %89 = vector.load %arg9[%c0_42, %c0_43, %c0_44, %c0_45] : memref<1x8x8x128xf32, #tpu.memory_space<vmem>>, vector<1x8x8x128xf32>
    %90 = vector.shape_cast %89 : vector<1x8x8x128xf32> to vector<8x8x128xf32>
    %91 = vector.shape_cast %88 : vector<8x8x128xf32> to vector<1x8x8x128xf32>
    tpu.vector_store %arg9[%c0_42, %c0_43, %c0_44, %c0_45], %91 {strides = array<i32>} : memref<1x8x8x128xf32, #tpu.memory_space<vmem>>, vector<1x8x8x128xf32>,
    return
  }
  func.func @transform_0(%arg0: i32, %arg1: i32) -> (i32, i32, i32, i32, i32) {
    %c0_i32 = arith.constant 0 : i32
    %c0_i32_0 = arith.constant 0 : i32
    %c0_i32_1 = arith.constant 0 : i32
    %c0_i32_2 = arith.constant 0 : i32
    return %arg0, %arg1, %c0_i32, %c0_i32_0, %c0_i32_1 : i32, i32, i32, i32, i32
  }
  func.func @transform_1(%arg0: i32, %arg1: i32) -> (i32, i32, i32) {
    %c0_i32 = arith.constant 0 : i32
    %c0_i32_0 = arith.constant 0 : i32
    %c0_i32_1 = arith.constant 0 : i32
    %c0_i32_2 = arith.constant 0 : i32
    return %c0_i32, %c0_i32_0, %c0_i32_1 : i32, i32, i32
  }
  func.func @transform_2(%arg0: i32, %arg1: i32) -> (i32, i32, i32) {
    %c0_i32 = arith.constant 0 : i32
    %c0_i32_0 = arith.constant 0 : i32
    %c0_i32_1 = arith.constant 0 : i32
    %c0_i32_2 = arith.constant 0 : i32
    return %c0_i32, %c0_i32_0, %c0_i32_1 : i32, i32, i32
  }
  func.func @transform_3(%arg0: i32, %arg1: i32) -> (i32, i32, i32) {
    %c0_i32 = arith.constant 0 : i32
    %c0_i32_0 = arith.constant 0 : i32
    %c0_i32_1 = arith.constant 0 : i32
    %c0_i32_2 = arith.constant 0 : i32
    return %c0_i32, %c0_i32_0, %c0_i32_1 : i32, i32, i32
  }
  func.func @transform_4(%arg0: i32, %arg1: i32) -> (i32, i32, i32) {
    %c0_i32 = arith.constant 0 : i32
    %c0_i32_0 = arith.constant 0 : i32
    %c0_i32_1 = arith.constant 0 : i32
    %c0_i32_2 = arith.constant 0 : i32
    return %c0_i32, %c0_i32_0, %c0_i32_1 : i32, i32, i32
  }
  func.func @transform_5(%arg0: i32, %arg1: i32) -> (i32, i32, i32) {
    %c0_i32 = arith.constant 0 : i32
    %c0_i32_0 = arith.constant 0 : i32
    %c0_i32_1 = arith.constant 0 : i32
    %c0_i32_2 = arith.constant 0 : i32
    return %c0_i32, %c0_i32_0, %c0_i32_1 : i32, i32, i32
  }
  func.func @transform_6(%arg0: i32, %arg1: i32) -> (i32, i32, i32) {
    %c0_i32 = arith.constant 0 : i32
    %c0_i32_0 = arith.constant 0 : i32
    %c0_i32_1 = arith.constant 0 : i32
    %c0_i32_2 = arith.constant 0 : i32
    return %c0_i32, %c0_i32_0, %c0_i32_1 : i32, i32, i32
  }
  func.func @transform_7(%arg0: i32, %arg1: i32) -> (i32, i32, i32, i32) {
    %c0_i32 = arith.constant 0 : i32
    %c0_i32_0 = arith.constant 0 : i32
    %c0_i32_1 = arith.constant 0 : i32
    return %arg0, %arg1, %c0_i32, %c0_i32_0 : i32, i32, i32, i32
  }
}

</mosaic_0001>

<llo_original>
// kernel: down_pallas.1
$region0: #{down_pallas.1}
  #allocation0 [shape = 'u32[]', space=smem, size = 0x4, offset = 0x4, fixed_abs, tag = 'smem constant byte address 0x4 - core index']
  #allocation1 [shape = 'u32[144,128]{1,0:T(1,128)}', space=vmem, size = 0x12000, scoped, tag = 'internal scratch']
  %s0 = inlined_call_operand.vmem [shape: bf16[2,1,24,10,128], index: 0, kind: input, shape index: {}]
  %s1 = inlined_call_operand.vmem [shape: bf16[3,12,128], index: 1, kind: input, shape index: {}]
  %s2 = inlined_call_operand.vmem [shape: f32[1,1,128], index: 2, kind: input, shape index: {}]
  %s3 = inlined_call_operand.vmem [shape: f32[1,1,128], index: 3, kind: input, shape index: {}]
  %s4 = inlined_call_operand.vmem [shape: bf16[3,384,128], index: 4, kind: input, shape index: {}]
  %s5 = inlined_call_operand.vmem [shape: f32[1,1,128], index: 5, kind: input, shape index: {}]
  %s6 = inlined_call_operand.vmem [shape: f32[1,1,128], index: 6, kind: input, shape index: {}]
  %s7 = inlined_call_operand.vmem [shape: f32[2,8,8,128], index: 7, kind: output, shape index: {}]
  %s8 = sld [smem:[#allocation0]]
  $region61: #{down_pallas.1} parent=0
    _
  %s10 = ssub.s32 1, %s8
  %s11 = scalar_select 0, %s10, %s8
  loop: start=0, step=1, limit=4
  $region2: #{down_pallas.1} parent=0 // loop_pre_header
    _
  $region3: #{down_pallas.1} parent=0 // loop_header
    %s13 = sphi 0, %s17
    %p14 = scmp.ge.s32.totalorder %s13, 4
    %s20 = sphi 0, %s32
    %s21 = sphi 0, %s28
    %s22 = sphi 0, %s20
    %s23 = sphi 0, %s21
    %s24 = sphi 0, %s22
    %s25 = sphi 0, %s23
    %s37 = sphi 0, %s39
    %s40 = sphi 0, %s37
    %s41 = sphi 0, %s40
    %s57 = sphi 0, %s41
    %s61 = sphi 0, %s61
    %s63 = sphi 0, %s61
    %s64 = sphi 0, %s63
    %s78 = sphi 0, %s64
    %s82 = sphi 0, %s82
    %s84 = sphi 0, %s82
    %s85 = sphi 0, %s84
    %s99 = sphi 0, %s85
    %s103 = sphi 0, %s103
    %s105 = sphi 0, %s103
    %s106 = sphi 0, %s105
    %s120 = sphi 0, %s106
    %s124 = sphi 0, %s124
    %s126 = sphi 0, %s124
    %s127 = sphi 0, %s126
    %s141 = sphi 0, %s127
    %s145 = sphi 0, %s145
    %s147 = sphi 0, %s145
    %s148 = sphi 0, %s147
    %s162 = sphi 0, %s148
    %s166 = sphi 0, %s166
    %s168 = sphi 0, %s166
    %s169 = sphi 0, %s168
    %s183 = sphi 0, %s169
    %s191 = sphi 0, %s193
    %s194 = sphi 0, %s191
    %s195 = sphi 0, %s194
    %s211 = sphi 0, %s195
  $region4: #{down_pallas.1} parent=0 // loop_header_branch
    %16 = sbr.rel (%p14) target = $region8
  $region5: #{down_pallas.1} parent=0 // loop_body
    %s18 = ssub.s32 %s13, 1
    %s19 = ssub.s32 %s13, 2
    %s26 = sadd.s32 1, %s21
    %p27 = scmp.ge.s32.totalorder %s26, 1
    %s28 = scalar_select %p27, 0, %s26
    %s29 = sadd.s32 1, %s20
    %s30 = scalar_select %p27, %s29, %s20
    %p31 = scmp.ge.s32.totalorder %s30, 2
    %s32 = scalar_select %p31, 0, %s30
    %s33 = ssub.s32 %s20, %s32
    %s34 = ssub.s32 %s21, %s28
    %s35 = sor.u32 %s33, %s34
    %p36 = scmp.eq.s32.totalorder %s35, 0
    %s38 = sadd.s32 %s37, 1
    %s39 = scalar_select %p36, %s37, %s38
    %p42 = pneg %p36
    %p43 = scmp.eq.s32.totalorder %s13, 1
    %p44 = por %p42, %p43
    %p45 = scmp.ne.s32.totalorder %s37, %s40
    %p46 = scmp.eq.s32.totalorder %s13, 0
    %p47 = por %p45, %p46
    %p48 = scmp.ne.s32.totalorder %s37, %s40
    %p49 = scmp.eq.s32.totalorder %s18, 1
    %p50 = por %p48, %p49
    %p51 = scmp.ne.s32.totalorder %s40, %s41
    %p52 = scmp.eq.s32.totalorder %s18, 0
    %p53 = por %p51, %p52
    %p54 = scmp.ne.s32.totalorder %s40, %s41
    %p55 = scmp.eq.s32.totalorder %s19, 1
    %p56 = por %p54, %p55
    %p58 = scmp.ne.s32.totalorder %s41, %s57
    %p59 = scmp.eq.s32.totalorder %s19, 0
    %p60 = por %p58, %p59
    %s62 = sadd.s32 %s61, 1
    %p65 = scmp.eq.s32.totalorder %s13, 1
    %p66 = scmp.ne.s32.totalorder %s61, %s63
    %p67 = scmp.eq.s32.totalorder %s13, 0
    %p68 = por %p66, %p67
    %p69 = scmp.ne.s32.totalorder %s61, %s63
    %p70 = scmp.eq.s32.totalorder %s18, 1
    %p71 = por %p69, %p70
    %p72 = scmp.ne.s32.totalorder %s63, %s64
    %p73 = scmp.eq.s32.totalorder %s18, 0
    %p74 = por %p72, %p73
    %p75 = scmp.ne.s32.totalorder %s63, %s64
    %p76 = scmp.eq.s32.totalorder %s19, 1
    %p77 = por %p75, %p76
    %p79 = scmp.ne.s32.totalorder %s64, %s78
    %p80 = scmp.eq.s32.totalorder %s19, 0
    %p81 = por %p79, %p80
    %s83 = sadd.s32 %s82, 1
    %p86 = scmp.eq.s32.totalorder %s13, 1
    %p87 = scmp.ne.s32.totalorder %s82, %s84
    %p88 = scmp.eq.s32.totalorder %s13, 0
    %p89 = por %p87, %p88
    %p90 = scmp.ne.s32.totalorder %s82, %s84
    %p91 = scmp.eq.s32.totalorder %s18, 1
    %p92 = por %p90, %p91
    %p93 = scmp.ne.s32.totalorder %s84, %s85
    %p94 = scmp.eq.s32.totalorder %s18, 0
    %p95 = por %p93, %p94
    %p96 = scmp.ne.s32.totalorder %s84, %s85
    %p97 = scmp.eq.s32.totalorder %s19, 1
    %p98 = por %p96, %p97
    %p100 = scmp.ne.s32.totalorder %s85, %s99
    %p101 = scmp.eq.s32.totalorder %s19, 0
    %p102 = por %p100, %p101
    %s104 = sadd.s32 %s103, 1
    %p107 = scmp.eq.s32.totalorder %s13, 1
    %p108 = scmp.ne.s32.totalorder %s103, %s105
    %p109 = scmp.eq.s32.totalorder %s13, 0
    %p110 = por %p108, %p109
    %p111 = scmp.ne.s32.totalorder %s103, %s105
    %p112 = scmp.eq.s32.totalorder %s18, 1
    %p113 = por %p111, %p112
    %p114 = scmp.ne.s32.totalorder %s105, %s106
    %p115 = scmp.eq.s32.totalorder %s18, 0
    %p116 = por %p114, %p115
    %p117 = scmp.ne.s32.totalorder %s105, %s106
    %p118 = scmp.eq.s32.totalorder %s19, 1
    %p119 = por %p117, %p118
    %p121 = scmp.ne.s32.totalorder %s106, %s120
    %p122 = scmp.eq.s32.totalorder %s19, 0
    %p123 = por %p121, %p122
    %s125 = sadd.s32 %s124, 1
    %p128 = scmp.eq.s32.totalorder %s13, 1
    %p129 = scmp.ne.s32.totalorder %s124, %s126
    %p130 = scmp.eq.s32.totalorder %s13, 0
    %p131 = por %p129, %p130
    %p132 = scmp.ne.s32.totalorder %s124, %s126
    %p133 = scmp.eq.s32.totalorder %s18, 1
    %p134 = por %p132, %p133
    %p135 = scmp.ne.s32.totalorder %s126, %s127
    %p136 = scmp.eq.s32.totalorder %s18, 0
    %p137 = por %p135, %p136
    %p138 = scmp.ne.s32.totalorder %s126, %s127
    %p139 = scmp.eq.s32.totalorder %s19, 1
    %p140 = por %p138, %p139
    %p142 = scmp.ne.s32.totalorder %s127, %s141
    %p143 = scmp.eq.s32.totalorder %s19, 0
    %p144 = por %p142, %p143
    %s146 = sadd.s32 %s145, 1
    %p149 = scmp.eq.s32.totalorder %s13, 1
    %p150 = scmp.ne.s32.totalorder %s145, %s147
    %p151 = scmp.eq.s32.totalorder %s13, 0
    %p152 = por %p150, %p151
    %p153 = scmp.ne.s32.totalorder %s145, %s147
    %p154 = scmp.eq.s32.totalorder %s18, 1
    %p155 = por %p153, %p154
    %p156 = scmp.ne.s32.totalorder %s147, %s148
    %p157 = scmp.eq.s32.totalorder %s18, 0
    %p158 = por %p156, %p157
    %p159 = scmp.ne.s32.totalorder %s147, %s148
    %p160 = scmp.eq.s32.totalorder %s19, 1
    %p161 = por %p159, %p160
    %p163 = scmp.ne.s32.totalorder %s148, %s162
    %p164 = scmp.eq.s32.totalorder %s19, 0
    %p165 = por %p163, %p164
    %s167 = sadd.s32 %s166, 1
    %p170 = scmp.eq.s32.totalorder %s13, 1
    %p171 = scmp.ne.s32.totalorder %s166, %s168
    %p172 = scmp.eq.s32.totalorder %s13, 0
    %p173 = por %p171, %p172
    %p174 = scmp.ne.s32.totalorder %s166, %s168
    %p175 = scmp.eq.s32.totalorder %s18, 1
    %p176 = por %p174, %p175
    %p177 = scmp.ne.s32.totalorder %s168, %s169
    %p178 = scmp.eq.s32.totalorder %s18, 0
    %p179 = por %p177, %p178
    %p180 = scmp.ne.s32.totalorder %s168, %s169
    %p181 = scmp.eq.s32.totalorder %s19, 1
    %p182 = por %p180, %p181
    %p184 = scmp.ne.s32.totalorder %s169, %s183
    %p185 = scmp.eq.s32.totalorder %s19, 0
    %p186 = por %p184, %p185
    %s187 = ssub.s32 %s20, %s32
    %s188 = ssub.s32 %s21, %s28
    %s189 = sor.u32 %s187, %s188
    %p190 = scmp.eq.s32.totalorder %s189, 0
    %s192 = sadd.s32 %s191, 1
    %s193 = scalar_select %p190, %s191, %s192
    %p196 = pneg %p190
    %p197 = scmp.eq.s32.totalorder %s13, 1
    %p198 = por %p196, %p197
    %p199 = scmp.ne.s32.totalorder %s191, %s194
    %p200 = scmp.eq.s32.totalorder %s13, 0
    %p201 = por %p199, %p200
    %p202 = scmp.ne.s32.totalorder %s191, %s194
    %p203 = scmp.eq.s32.totalorder %s18, 1
    %p204 = por %p202, %p203
    %p205 = scmp.ne.s32.totalorder %s194, %s195
    %p206 = scmp.eq.s32.totalorder %s18, 0
    %p207 = por %p205, %p206
    %p208 = scmp.ne.s32.totalorder %s194, %s195
    %p209 = scmp.eq.s32.totalorder %s19, 1
    %p210 = por %p208, %p209
    %p212 = scmp.ne.s32.totalorder %s195, %s211
    %p213 = scmp.eq.s32.totalorder %s19, 0
    %p214 = por %p212, %p213
    %p215 = scmp.le.s32.totalorder 1, %s13
    %p216 = scmp.lt.s32.totalorder %s13, 3
    %p217 = pnand %p215, %p216
    %p218 = pneg %p217
    // Predicated region
    $region9: #{down_pallas.1} parent=5 // pred_check
      _
    $region10: #{down_pallas.1} parent=5 // pred_check_branch
      %220 = sbr.rel (%p217) target = $region12
    $region11: #{down_pallas.1} parent=5 // pred_region
      %s221 = ssub.s32 %s13, 1
      // Predicated region
      $region13: #{down_pallas.1} parent=11 // pred_check
        %p222 = pneg %p74
      $region14: #{down_pallas.1} parent=11 // pred_check_branch
        %224 = sbr.rel (%p222) target = $region16
      $region15: #{down_pallas.1} parent=11 // pred_region
        _
      $region16: #{down_pallas.1} parent=11 // pred_fallthru
        _
      // Predicated region
      $region17: #{down_pallas.1} parent=11 // pred_check
        %p225 = pneg %p95
      $region18: #{down_pallas.1} parent=11 // pred_check_branch
        %227 = sbr.rel (%p225) target = $region20
      $region19: #{down_pallas.1} parent=11 // pred_region
        _
      $region20: #{down_pallas.1} parent=11 // pred_fallthru
        _
      // Predicated region
      $region21: #{down_pallas.1} parent=11 // pred_check
        %p228 = pneg %p116
      $region22: #{down_pallas.1} parent=11 // pred_check_branch
        %230 = sbr.rel (%p228) target = $region24
      $region23: #{down_pallas.1} parent=11 // pred_region
        _
      $region24: #{down_pallas.1} parent=11 // pred_fallthru
        _
      // Predicated region
      $region25: #{down_pallas.1} parent=11 // pred_check
        %p231 = pneg %p137
      $region26: #{down_pallas.1} parent=11 // pred_check_branch
        %233 = sbr.rel (%p231) target = $region28
      $region27: #{down_pallas.1} parent=11 // pred_region
        _
      $region28: #{down_pallas.1} parent=11 // pred_fallthru
        _
      // Predicated region
      $region29: #{down_pallas.1} parent=11 // pred_check
        %p234 = pneg %p158
      $region30: #{down_pallas.1} parent=11 // pred_check_branch
        %236 = sbr.rel (%p234) target = $region32
      $region31: #{down_pallas.1} parent=11 // pred_region
        _
      $region32: #{down_pallas.1} parent=11 // pred_fallthru
        _
      // Predicated region
      $region33: #{down_pallas.1} parent=11 // pred_check
        %p237 = pneg %p179
      $region34: #{down_pallas.1} parent=11 // pred_check_branch
        %239 = sbr.rel (%p237) target = $region36
      $region35: #{down_pallas.1} parent=11 // pred_region
        _
      $region36: #{down_pallas.1} parent=11 // pred_fallthru
        _
    $region12: #{down_pallas.1} parent=5 // pred_fallthru
      _
    %p240 = scmp.lt.s32.totalorder %s13, 2
    // Predicated region
    $region37: #{down_pallas.1} parent=5 // pred_check
      %p241 = pneg %p240
    $region38: #{down_pallas.1} parent=5 // pred_check_branch
      %243 = sbr.rel (%p241) target = $region40
    $region39: #{down_pallas.1} parent=5 // pred_region
      // Predicated region
      $region41: #{down_pallas.1} parent=39 // pred_check
        %p244 = pneg %p47
      $region42: #{down_pallas.1} parent=39 // pred_check_branch
        %246 = sbr.rel (%p244) target = $region44
      $region43: #{down_pallas.1} parent=39 // pred_region
        %p247 = scmp.lt.s32.totalorder %s20, 1
        %s248 = scalar_select %p247, %s20, 1
        %p249 = scmp.lt.s32.totalorder %s21, 0
        %s250 = scalar_select %p249, %s21, 0
        %s251 = smul.addr %s250, 48
        %s252 = smul.addr %s248, 48
        %s253 = sadd.s32 %s251, %s252
        %s254 = smul.addr %s253, 4
        %s255 = scalar_lea.vmem %s0, %s254
      $region44: #{down_pallas.1} parent=39 // pred_fallthru
        _
    $region40: #{down_pallas.1} parent=5 // pred_fallthru
      _
    %p256 = scmp.le.s32.totalorder 1, %s13
    %p257 = scmp.lt.s32.totalorder %s13, 3
    %p258 = pnand %p256, %p257
    %p259 = pneg %p258
    // Predicated region
    $region45: #{down_pallas.1} parent=5 // pred_check
      _
    $region46: #{down_pallas.1} parent=5 // pred_check_branch
      %261 = sbr.rel (%p258) target = $region48
    $region47: #{down_pallas.1} parent=5 // pred_region
      %s262 = ssub.s32 %s13, 1
      %p263 = scmp.lt.s32.totalorder %s22, 1
      %s264 = scalar_select %p263, %s22, 1
      %p265 = scmp.lt.s32.totalorder %s23, 0
      %s266 = scalar_select %p265, %s23, 0
      %s267 = smul.addr %s266, 48
      %s268 = smul.addr %s264, 48
      %s269 = sadd.s32 %s267, %s268
      %s270 = smul.addr %s269, 4
      %s271 = scalar_lea.vmem %s0, %s270
      %p272 = pneg %p53
      %p273 = pneg %p50
      %p274 = pneg %p74
      %p275 = pneg %p71
      %p276 = pneg %p95
      %p277 = pneg %p92
      %p278 = pneg %p116
      %p279 = pneg %p113
      %p280 = pneg %p137
      %p281 = pneg %p134
      %p282 = pneg %p158
      %p283 = pneg %p155
      %p284 = pneg %p179
      %p285 = pneg %p176
      %p286 = pneg %p207
      %p287 = pneg %p204
      %s288 = smul.u32 8, %s23
      %p289 = scmp.lt.s32.totalorder %s22, 1
      %s290 = scalar_select %p289, %s22, 1
      %p291 = scmp.lt.s32.totalorder %s288, 7
      %s292 = scalar_select %p291, %s288, 7
      %s293 = smul.addr %s290, 8
      %s294 = sadd.s32 %s292, %s293
      %s295 = smul.addr %s294, 8
      %s296 = scalar_lea.vmem %s7, %s295
      %p297 = scmp.lt.s32.totalorder %s22, 1
      %s298 = scalar_select %p297, %s22, 1
      %p299 = scmp.lt.s32.totalorder %s23, 0
      %s300 = scalar_select %p299, %s23, 0
      %s301 = smul.addr %s300, 48
      %s302 = smul.addr %s298, 48
      %s303 = sadd.s32 %s301, %s302
      %s304 = smul.addr %s303, 4
      %s305 = scalar_lea.vmem %s0, %s304
      %s306 = smul.u32 8, %s23
      %p307 = scmp.lt.s32.totalorder %s22, 1
      %s308 = scalar_select %p307, %s22, 1
      %p309 = scmp.lt.s32.totalorder %s306, 7
      %s310 = scalar_select %p309, %s306, 7
      %s311 = smul.addr %s308, 8
      %s312 = sadd.s32 %s310, %s311
      %s313 = smul.addr %s312, 8
      %s314 = scalar_lea.vmem %s7, %s313
      %s315 = smul.u32 8, %s23
      %v317 = vld [vmem:[%s305] sm:$0xf]
      %v318 = vld [vmem:[%s305 + $0x4] sm:$0x1]
      %v319 = vld [vmem:[%s305 + $0x8] sm:$0xf]
      %v320 = vld [vmem:[%s305 + $0xc] sm:$0x1]
      %v321 = vld [vmem:[%s305 + $0x10] sm:$0xf]
      %v322 = vld [vmem:[%s305 + $0x14] sm:$0x1]
      %v323 = vld [vmem:[%s305 + $0x18] sm:$0xf]
      %v324 = vld [vmem:[%s305 + $0x1c] sm:$0x1]
      %v325 = vld [vmem:[%s305 + $0x20] sm:$0xf]
      %v326 = vld [vmem:[%s305 + $0x24] sm:$0x1]
      %v327 = vld [vmem:[%s305 + $0x28] sm:$0xf]
      %v328 = vld [vmem:[%s305 + $0x2c] sm:$0x1]
      %v329 = vld [vmem:[%s305 + $0x30] sm:$0xf]
      %v330 = vld [vmem:[%s305 + $0x34] sm:$0x1]
      %v331 = vld [vmem:[%s305 + $0x38] sm:$0xf]
      %v332 = vld [vmem:[%s305 + $0x3c] sm:$0x1]
      %v333 = vld [vmem:[%s305 + $0x40] sm:$0xf]
      %v334 = vld [vmem:[%s305 + $0x44] sm:$0x1]
      %v335 = vld [vmem:[%s305 + $0x48] sm:$0xf]
      %v336 = vld [vmem:[%s305 + $0x4c] sm:$0x1]
      %v337 = vld [vmem:[%s305 + $0x50] sm:$0xf]
      %v338 = vld [vmem:[%s305 + $0x54] sm:$0x1]
      %v339 = vld [vmem:[%s305 + $0x58] sm:$0xf]
      %v340 = vld [vmem:[%s305 + $0x5c] sm:$0x1]
      %v341 = vld [vmem:[%s305 + $0x60] sm:$0xf]
      %v342 = vld [vmem:[%s305 + $0x64] sm:$0x1]
      %v343 = vld [vmem:[%s305 + $0x68] sm:$0xf]
      %v344 = vld [vmem:[%s305 + $0x6c] sm:$0x1]
      %v345 = vld [vmem:[%s305 + $0x70] sm:$0xf]
      %v346 = vld [vmem:[%s305 + $0x74] sm:$0x1]
      %v347 = vld [vmem:[%s305 + $0x78] sm:$0xf]
      %v348 = vld [vmem:[%s305 + $0x7c] sm:$0x1]
      %v349 = vld [vmem:[%s305 + $0x80] sm:$0xf]
      %v350 = vld [vmem:[%s305 + $0x84] sm:$0x1]
      %v351 = vld [vmem:[%s305 + $0x88] sm:$0xf]
      %v352 = vld [vmem:[%s305 + $0x8c] sm:$0x1]
      %v353 = vld [vmem:[%s305 + $0x90] sm:$0xf]
      %v354 = vld [vmem:[%s305 + $0x94] sm:$0x1]
      %v355 = vld [vmem:[%s305 + $0x98] sm:$0xf]
      %v356 = vld [vmem:[%s305 + $0x9c] sm:$0x1]
      %v357 = vld [vmem:[%s305 + $0xa0] sm:$0xf]
      %v358 = vld [vmem:[%s305 + $0xa4] sm:$0x1]
      %v359 = vld [vmem:[%s305 + $0xa8] sm:$0xf]
      %v360 = vld [vmem:[%s305 + $0xac] sm:$0x1]
      %v361 = vld [vmem:[%s305 + $0xb0] sm:$0xf]
      %v362 = vld [vmem:[%s305 + $0xb4] sm:$0x1]
      %v363 = vld [vmem:[%s305 + $0xb8] sm:$0xf]
      %v364 = vld [vmem:[%s305 + $0xbc] sm:$0x1]
      %v365 = vmax.bf16 %v317, %v319
      %v366 = vmax.bf16 %v318, %v320
      %v367 = vmax.bf16 %v321, %v323
      %v368 = vmax.bf16 %v322, %v324
      %v369 = vmax.bf16 %v325, %v327
      %v370 = vmax.bf16 %v326, %v328
      %v371 = vmax.bf16 %v329, %v331
      %v372 = vmax.bf16 %v330, %v332
      %v373 = vmax.bf16 %v333, %v335
      %v374 = vmax.bf16 %v334, %v336
      %v375 = vmax.bf16 %v337, %v339
      %v376 = vmax.bf16 %v338, %v340
      %v377 = vmax.bf16 %v341, %v343
      %v378 = vmax.bf16 %v342, %v344
      %v379 = vmax.bf16 %v345, %v347
      %v380 = vmax.bf16 %v346, %v348
      %v381 = vmax.bf16 %v349, %v351
      %v382 = vmax.bf16 %v350, %v352
      %v383 = vmax.bf16 %v353, %v355
      %v384 = vmax.bf16 %v354, %v356
      %v385 = vmax.bf16 %v357, %v359
      %v386 = vmax.bf16 %v358, %v360
      %v387 = vmax.bf16 %v361, %v363
      %v388 = vmax.bf16 %v362, %v364
      %413 = vrot.lane.b32.xlu0 %v365, 124
      %v414 = vpop.permute.xlu0 %413
      %415 = vrot.lane.b32.xlu0 %v366, 124
      %v416 = vpop.permute.xlu0 %415
      %417 = vrot.lane.b32.xlu0 %v367, 124
      %v418 = vpop.permute.xlu0 %417
      %419 = vrot.lane.b32.xlu0 %v368, 124
      %v420 = vpop.permute.xlu0 %419
      %421 = vrot.lane.b32.xlu0 %v369, 124
      %v422 = vpop.permute.xlu0 %421
      %423 = vrot.lane.b32.xlu0 %v370, 124
      %v424 = vpop.permute.xlu0 %423
      %425 = vrot.lane.b32.xlu0 %v371, 124
      %v426 = vpop.permute.xlu0 %425
      %427 = vrot.lane.b32.xlu0 %v372, 124
      %v428 = vpop.permute.xlu0 %427
      %429 = vrot.lane.b32.xlu0 %v373, 124
      %v430 = vpop.permute.xlu0 %429
      %431 = vrot.lane.b32.xlu0 %v374, 124
      %v432 = vpop.permute.xlu0 %431
      %433 = vrot.lane.b32.xlu0 %v375, 124
      %v434 = vpop.permute.xlu0 %433
      %435 = vrot.lane.b32.xlu0 %v376, 124
      %v436 = vpop.permute.xlu0 %435
      %437 = vrot.lane.b32.xlu0 %v377, 124
      %v438 = vpop.permute.xlu0 %437
      %439 = vrot.lane.b32.xlu0 %v378, 124
      %v440 = vpop.permute.xlu0 %439
      %441 = vrot.lane.b32.xlu0 %v379, 124
      %v442 = vpop.permute.xlu0 %441
      %443 = vrot.lane.b32.xlu0 %v380, 124
      %v444 = vpop.permute.xlu0 %443
      %445 = vrot.lane.b32.xlu0 %v381, 124
      %v446 = vpop.permute.xlu0 %445
      %447 = vrot.lane.b32.xlu0 %v382, 124
      %v448 = vpop.permute.xlu0 %447
      %449 = vrot.lane.b32.xlu0 %v383, 124
      %v450 = vpop.permute.xlu0 %449
      %451 = vrot.lane.b32.xlu0 %v384, 124
      %v452 = vpop.permute.xlu0 %451
      %453 = vrot.lane.b32.xlu0 %v385, 124
      %v454 = vpop.permute.xlu0 %453
      %455 = vrot.lane.b32.xlu0 %v386, 124
      %v456 = vpop.permute.xlu0 %455
      %457 = vrot.lane.b32.xlu0 %v387, 124
      %v458 = vpop.permute.xlu0 %457
      %459 = vrot.lane.b32.xlu0 %v388, 124
      %v460 = vpop.permute.xlu0 %459
      %v485 = vmax.bf16 %v365, %v414
      %v486 = vmax.bf16 %v366, %v416
      %v487 = vmax.bf16 %v367, %v418
      %v488 = vmax.bf16 %v368, %v420
      %v489 = vmax.bf16 %v369, %v422
      %v490 = vmax.bf16 %v370, %v424
      %v491 = vmax.bf16 %v371, %v426
      %v492 = vmax.bf16 %v372, %v428
      %v493 = vmax.bf16 %v373, %v430
      %v494 = vmax.bf16 %v374, %v432
      %v495 = vmax.bf16 %v375, %v434
      %v496 = vmax.bf16 %v376, %v436
      %v497 = vmax.bf16 %v377, %v438
      %v498 = vmax.bf16 %v378, %v440
      %v499 = vmax.bf16 %v379, %v442
      %v500 = vmax.bf16 %v380, %v444
      %v501 = vmax.bf16 %v381, %v446
      %v502 = vmax.bf16 %v382, %v448
      %v503 = vmax.bf16 %v383, %v450
      %v504 = vmax.bf16 %v384, %v452
      %v505 = vmax.bf16 %v385, %v454
      %v506 = vmax.bf16 %v386, %v456
      %v507 = vmax.bf16 %v387, %v458
      %v508 = vmax.bf16 %v388, %v460
      %v529 = vunpack.c.l.b16 %v485
      %v530 = vunpack.c.l.b16 %v486
      %v531 = vunpack.c.l.b16 %v487
      %v532 = vunpack.c.l.b16 %v488
      %v533 = vunpack.c.l.b16 %v489
      %v534 = vunpack.c.l.b16 %v490
      %v535 = vunpack.c.l.b16 %v491
      %v536 = vunpack.c.l.b16 %v492
      %v537 = vunpack.c.l.b16 %v493
      %v538 = vunpack.c.l.b16 %v494
      %v539 = vunpack.c.l.b16 %v495
      %v540 = vunpack.c.l.b16 %v496
      %v541 = vunpack.c.l.b16 %v497
      %v542 = vunpack.c.l.b16 %v498
      %v543 = vunpack.c.l.b16 %v499
      %v544 = vunpack.c.l.b16 %v500
      %v545 = vunpack.c.l.b16 %v501
      %v546 = vunpack.c.l.b16 %v502
      %v547 = vunpack.c.l.b16 %v503
      %v548 = vunpack.c.l.b16 %v504
      %v549 = vpack.c.b16 %v530, %v529
      %v550 = vpack.c.b16 %v532, %v531
      %v551 = vpack.c.b16 %v534, %v533
      %v552 = vpack.c.b16 %v536, %v535
      %v553 = vpack.c.b16 %v538, %v537
      %v554 = vpack.c.b16 %v540, %v539
      %v555 = vpack.c.b16 %v542, %v541
      %v556 = vpack.c.b16 %v544, %v543
      %v557 = vpack.c.b16 %v546, %v545
      %v558 = vpack.c.b16 %v548, %v547
      %v560 = vshrl.u32 %v549, 16
      %v562 = vshll.u32 %v549, 16
      %v564 = vrot.slane %v562, 1
      %v565 = vor.u32 %v560, %v564
      %v567 = vshrl.u32 %v550, 16
      %v569 = vshll.u32 %v550, 16
      %v571 = vrot.slane %v569, 1
      %v572 = vor.u32 %v567, %v571
      %v574 = vshrl.u32 %v551, 16
      %v576 = vshll.u32 %v551, 16
      %v578 = vrot.slane %v576, 1
      %v579 = vor.u32 %v574, %v578
      %v581 = vshrl.u32 %v552, 16
      %v583 = vshll.u32 %v552, 16
      %v585 = vrot.slane %v583, 1
      %v586 = vor.u32 %v581, %v585
      %v588 = vshrl.u32 %v553, 16
      %v590 = vshll.u32 %v553, 16
      %v592 = vrot.slane %v590, 1
      %v593 = vor.u32 %v588, %v592
      %v595 = vshrl.u32 %v554, 16
      %v597 = vshll.u32 %v554, 16
      %v599 = vrot.slane %v597, 1
      %v600 = vor.u32 %v595, %v599
      %v602 = vshrl.u32 %v555, 16
      %v604 = vshll.u32 %v555, 16
      %v606 = vrot.slane %v604, 1
      %v607 = vor.u32 %v602, %v606
      %v609 = vshrl.u32 %v556, 16
      %v611 = vshll.u32 %v556, 16
      %v613 = vrot.slane %v611, 1
      %v614 = vor.u32 %v609, %v613
      %v616 = vshrl.u32 %v557, 16
      %v618 = vshll.u32 %v557, 16
      %v620 = vrot.slane %v618, 1
      %v621 = vor.u32 %v616, %v620
      %v623 = vshrl.u32 %v558, 16
      %v625 = vshll.u32 %v558, 16
      %v627 = vrot.slane %v625, 1
      %v628 = vor.u32 %v623, %v627
      %629 = vrot.lane.b32.xlu0 %v565, 4
      %v630 = vpop.permute.xlu0 %629
      %631 = vrot.lane.b32.xlu0 %v572, 4
      %v632 = vpop.permute.xlu0 %631
      %633 = vrot.lane.b32.xlu0 %v579, 4
      %v634 = vpop.permute.xlu0 %633
      %635 = vrot.lane.b32.xlu0 %v586, 4
      %v636 = vpop.permute.xlu0 %635
      %637 = vrot.lane.b32.xlu0 %v593, 4
      %v638 = vpop.permute.xlu0 %637
      %639 = vrot.lane.b32.xlu0 %v600, 4
      %v640 = vpop.permute.xlu0 %639
      %641 = vrot.lane.b32.xlu0 %v607, 4
      %v642 = vpop.permute.xlu0 %641
      %643 = vrot.lane.b32.xlu0 %v614, 4
      %v644 = vpop.permute.xlu0 %643
      %645 = vrot.lane.b32.xlu0 %v621, 4
      %v646 = vpop.permute.xlu0 %645
      %647 = vrot.lane.b32.xlu0 %v628, 4
      %v648 = vpop.permute.xlu0 %647
      %v649 = vrot.slane %v549, 1
      %v650 = vrot.slane %v550, 1
      %v651 = vrot.slane %v551, 1
      %v652 = vrot.slane %v552, 1
      %v653 = vrot.slane %v553, 1
      %v654 = vrot.slane %v554, 1
      %v655 = vrot.slane %v555, 1
      %v656 = vrot.slane %v556, 1
      %v657 = vrot.slane %v557, 1
      %v658 = vrot.slane %v558, 1
      %659 = vrot.lane.b32.xlu0 %v649, 8
      %v660 = vpop.permute.xlu0 %659
      %661 = vrot.lane.b32.xlu0 %v650, 8
      %v662 = vpop.permute.xlu0 %661
      %663 = vrot.lane.b32.xlu0 %v651, 8
      %v664 = vpop.permute.xlu0 %663
      %665 = vrot.lane.b32.xlu0 %v652, 8
      %v666 = vpop.permute.xlu0 %665
      %667 = vrot.lane.b32.xlu0 %v653, 8
      %v668 = vpop.permute.xlu0 %667
      %669 = vrot.lane.b32.xlu0 %v654, 8
      %v670 = vpop.permute.xlu0 %669
      %671 = vrot.lane.b32.xlu0 %v655, 8
      %v672 = vpop.permute.xlu0 %671
      %673 = vrot.lane.b32.xlu0 %v656, 8
      %v674 = vpop.permute.xlu0 %673
      %675 = vrot.lane.b32.xlu0 %v657, 8
      %v676 = vpop.permute.xlu0 %675
      %677 = vrot.lane.b32.xlu0 %v658, 8
      %v678 = vpop.permute.xlu0 %677
      %vm679 = vcmask 31744
      %v682 = vsel %vm679, %v485, %v630
      %v685 = vsel %vm679, %v487, %v632
      %v688 = vsel %vm679, %v489, %v634
      %v691 = vsel %vm679, %v491, %v636
      %v694 = vsel %vm679, %v493, %v638
      %v697 = vsel %vm679, %v495, %v640
      %v700 = vsel %vm679, %v497, %v642
      %v703 = vsel %vm679, %v499, %v644
      %v706 = vsel %vm679, %v501, %v646
      %v709 = vsel %vm679, %v503, %v648
      %vm710 = vcmask 64512
      %v712 = vsel %vm710, %v682, %v660
      %v714 = vsel %vm710, %v685, %v662
      %v716 = vsel %vm710, %v688, %v664
      %v718 = vsel %vm710, %v691, %v666
      %v720 = vsel %vm710, %v694, %v668
      %v722 = vsel %vm710, %v697, %v670
      %v724 = vsel %vm710, %v700, %v672
      %v726 = vsel %vm710, %v703, %v674
      %v728 = vsel %vm710, %v706, %v676
      %v730 = vsel %vm710, %v709, %v678
      %v731 = vld [vmem:[%s1] sm:$0xf]
      %v732 = vld [vmem:[%s1 + $0x4] sm:$0x3]
      %v735 = vunpack.c.l.b16 %v505
      %v736 = vunpack.c.l.b16 %v506
      %v737 = vpack.c.b16 %v736, %v735
      %v739 = vshrl.u32 %v737, 16
      %v741 = vshll.u32 %v737, 16
      %v743 = vrot.slane %v741, 1
      %v744 = vor.u32 %v739, %v743
      %745 = vrot.lane.b32.xlu0 %v744, 4
      %v746 = vpop.permute.xlu0 %745
      %v747 = vrot.slane %v737, 1
      %748 = vrot.lane.b32.xlu0 %v747, 8
      %v749 = vpop.permute.xlu0 %748
      %v752 = vsel %vm679, %v505, %v746
      %v754 = vsel %vm710, %v752, %v749
      %s755 = scalar_lea.vmem %s1, 8
      %v756 = vld [vmem:[%s755] sm:$0xf]
      %v757 = vld [vmem:[%s755 + $0x4] sm:$0x3]
      %v768 = vunpack.c.l.b16 %v714
      %v769 = vunpack.c.l.b16 %v716
      %v770 = vunpack.c.l.b16 %v718
      %v771 = vunpack.c.l.b16 %v720
      %v772 = vunpack.c.l.b16 %v722
      %v773 = vunpack.c.l.b16 %v724
      %v774 = vunpack.c.l.b16 %v726
      %v775 = vunpack.c.l.b16 %v728
      %v776 = vunpack.c.l.b16 %v730
      %v777 = vunpack.c.l.b16 %v754
      %v778 = vpack.c.b16 %v769, %v768
      %v779 = vpack.c.b16 %v771, %v770
      %v780 = vpack.c.b16 %v773, %v772
      %v781 = vpack.c.b16 %v775, %v774
      %v782 = vpack.c.b16 %v777, %v776
      %v785 = vunpack.c.l.b16 %v756
      %v786 = vunpack.c.l.b16 %v757
      %v787 = vpack.c.b16 %v786, %v785
      %vm788 = vcmask 97280
      %v790 = vsel %vm788, %v778, 0
      %v793 = vsel %vm788, %v779, 0
      %v796 = vsel %vm788, %v780, 0
      %v799 = vsel %vm788, %v781, 0
      %v802 = vsel %vm788, %v782, 0
      %vm804 = vcmask 1045504
      %v806 = vsel %vm804, %v787, 0
      %808 = vmatprep.subr.bf16.mxu0 0
      %809 = vmatpush1.bf16.msra.mxu0 0
      %810 = vmatprep.subr.bf16.mxu0 0
      %811 = vmatpush1.bf16.msra.mxu0 0
      %812 = vmatprep.subr.bf16.mxu0 0
      %813 = vmatpush1.bf16.msra.mxu0 0
      %814 = vmatprep.subr.bf16.mxu0 0
      %815 = vmatpush1.bf16.msra.mxu0 0
      %816 = vmatprep.subr.bf16.mxu0 0
      %817 = vmatpush1.bf16.msra.mxu0 0
      %818 = vmatprep.subr.bf16.mxu0 0
      %819 = vmatpush1.bf16.msra.mxu0 0
      %820 = vmatprep.subr.bf16.mxu0 0
      %821 = vmatpush1.bf16.msra.mxu0 0
      %822 = vmatprep.subr.bf16.mxu0 0
      %823 = vmatpush1.bf16.msra.mxu0 %v806
      %824 = vmatprep.subr.bf16.mxu0 0
      %825 = vmatpush2.bf16.msra.mxu0 0
      %826 = vmatprep.subr.bf16.mxu0 0
      %827 = vmatpush2.bf16.msra.mxu0 0
      %828 = vmatprep.subr.bf16.mxu0 0
      %829 = vmatpush2.bf16.msra.mxu0 0
      %830 = vmatprep.subr.bf16.mxu0 0
      %831 = vmatpush2.bf16.msra.mxu0 0
      %832 = vmatprep.subr.bf16.mxu0 0
      %833 = vmatpush2.bf16.msra.mxu0 0
      %834 = vmatprep.subr.bf16.mxu0 0
      %835 = vmatpush2.bf16.msra.mxu0 0
      %836 = vmatprep.subr.bf16.mxu0 0
      %837 = vmatpush2.bf16.msra.mxu0 0
      %838 = vmatprep.subr.bf16.mxu0 0
      %839 = vmatpush2.bf16.msra.mxu0 0
      %840 = vmatprep.mubr.bf16.mxu0 0
      %841 = vmatmul.mubr.bf16.gmra.mxu0 %v790
      %v842 = vpop.f32.mrf.mxu0
      %v843 = vadd.f32 0.0, %v842
      %v844 = vpop.f32.mrf.mxu0
      %v845 = vpop.f32.mrf.mxu0
      %v846 = vadd.f32 0.0, %v845
      %v847 = vpop.f32.mrf.mxu0
      %848 = vmatprep.mubr.bf16.mxu0 0
      %849 = vmatmul.mubr.bf16.gmra.mxu0 %v793
      %v850 = vpop.f32.mrf.mxu0
      %v851 = vadd.f32 0.0, %v850
      %v852 = vpop.f32.mrf.mxu0
      %v853 = vpop.f32.mrf.mxu0
      %v854 = vadd.f32 0.0, %v853
      %v855 = vpop.f32.mrf.mxu0
      %856 = vmatprep.mubr.bf16.mxu0 0
      %857 = vmatmul.mubr.bf16.gmra.mxu0 %v796
      %v858 = vpop.f32.mrf.mxu0
      %v859 = vadd.f32 0.0, %v858
      %v860 = vpop.f32.mrf.mxu0
      %v861 = vpop.f32.mrf.mxu0
      %v862 = vadd.f32 0.0, %v861
      %v863 = vpop.f32.mrf.mxu0
      %864 = vmatprep.mubr.bf16.mxu0 0
      %865 = vmatmul.mubr.bf16.gmra.mxu0 %v799
      %v866 = vpop.f32.mrf.mxu0
      %v867 = vadd.f32 0.0, %v866
      %v868 = vpop.f32.mrf.mxu0
      %v869 = vpop.f32.mrf.mxu0
      %v870 = vadd.f32 0.0, %v869
      %v871 = vpop.f32.mrf.mxu0
      %872 = vmatprep.mubr.bf16.mxu0 0
      %873 = vmatmul.mubr.bf16.gmra.mxu0 %v802
      %v874 = vpop.f32.mrf.mxu0
      %v875 = vadd.f32 0.0, %v874
      %v876 = vpop.f32.mrf.mxu0
      %v877 = vpop.f32.mrf.mxu0
      %v878 = vadd.f32 0.0, %v877
      %v879 = vpop.f32.mrf.mxu0
      %880 = vdwg.mxu0
      %v882 = vunpack.c.l.b16 %v712
      %v883 = vpack.c.b16 %v768, %v882
      %v884 = vpack.c.b16 %v770, %v769
      %v885 = vpack.c.b16 %v772, %v771
      %v886 = vpack.c.b16 %v774, %v773
      %v887 = vpack.c.b16 %v776, %v775
      %v890 = vunpack.c.l.b16 %v731
      %v891 = vunpack.c.l.b16 %v732
      %v892 = vpack.c.b16 %v891, %v890
      %v894 = vsel %vm788, %v883, 0
      %v897 = vsel %vm788, %v884, 0
      %v900 = vsel %vm788, %v885, 0
      %v903 = vsel %vm788, %v886, 0
      %v906 = vsel %vm788, %v887, 0
      %v909 = vsel %vm804, %v892, 0
      %911 = vmatprep.subr.bf16.mxu0 0
      %912 = vmatpush1.bf16.msra.mxu0 0
      %913 = vmatprep.subr.bf16.mxu0 0
      %914 = vmatpush1.bf16.msra.mxu0 0
      %915 = vmatprep.subr.bf16.mxu0 0
      %916 = vmatpush1.bf16.msra.mxu0 0
      %917 = vmatprep.subr.bf16.mxu0 0
      %918 = vmatpush1.bf16.msra.mxu0 0
      %919 = vmatprep.subr.bf16.mxu0 0
      %920 = vmatpush1.bf16.msra.mxu0 0
      %921 = vmatprep.subr.bf16.mxu0 0
      %922 = vmatpush1.bf16.msra.mxu0 0
      %923 = vmatprep.subr.bf16.mxu0 0
      %924 = vmatpush1.bf16.msra.mxu0 0
      %925 = vmatprep.subr.bf16.mxu0 0
      %926 = vmatpush1.bf16.msra.mxu0 %v909
      %927 = vmatprep.subr.bf16.mxu0 0
      %928 = vmatpush2.bf16.msra.mxu0 0
      %929 = vmatprep.subr.bf16.mxu0 0
      %930 = vmatpush2.bf16.msra.mxu0 0
      %931 = vmatprep.subr.bf16.mxu0 0
      %932 = vmatpush2.bf16.msra.mxu0 0
      %933 = vmatprep.subr.bf16.mxu0 0
      %934 = vmatpush2.bf16.msra.mxu0 0
      %935 = vmatprep.subr.bf16.mxu0 0
      %936 = vmatpush2.bf16.msra.mxu0 0
      %937 = vmatprep.subr.bf16.mxu0 0
      %938 = vmatpush2.bf16.msra.mxu0 0
      %939 = vmatprep.subr.bf16.mxu0 0
      %940 = vmatpush2.bf16.msra.mxu0 0
      %941 = vmatprep.subr.bf16.mxu0 0
      %942 = vmatpush2.bf16.msra.mxu0 0
      %943 = vmatprep.mubr.bf16.mxu0 0
      %944 = vmatmul.mubr.bf16.gmra.mxu0 %v894
      %v945 = vpop.f32.mrf.mxu0
      %v946 = vadd.f32 %v843, %v945
      %v947 = vpop.f32.mrf.mxu0
      %v948 = vpop.f32.mrf.mxu0
      %v949 = vadd.f32 %v846, %v948
      %v950 = vpop.f32.mrf.mxu0
      %951 = vmatprep.mubr.bf16.mxu0 0
      %952 = vmatmul.mubr.bf16.gmra.mxu0 %v897
      %v953 = vpop.f32.mrf.mxu0
      %v954 = vadd.f32 %v851, %v953
      %v955 = vpop.f32.mrf.mxu0
      %v956 = vpop.f32.mrf.mxu0
      %v957 = vadd.f32 %v854, %v956
      %v958 = vpop.f32.mrf.mxu0
      %959 = vmatprep.mubr.bf16.mxu0 0
      %960 = vmatmul.mubr.bf16.gmra.mxu0 %v900
      %v961 = vpop.f32.mrf.mxu0
      %v962 = vadd.f32 %v859, %v961
      %v963 = vpop.f32.mrf.mxu0
      %v964 = vpop.f32.mrf.mxu0
      %v965 = vadd.f32 %v862, %v964
      %v966 = vpop.f32.mrf.mxu0
      %967 = vmatprep.mubr.bf16.mxu0 0
      %968 = vmatmul.mubr.bf16.gmra.mxu0 %v903
      %v969 = vpop.f32.mrf.mxu0
      %v970 = vadd.f32 %v867, %v969
      %v971 = vpop.f32.mrf.mxu0
      %v972 = vpop.f32.mrf.mxu0
      %v973 = vadd.f32 %v870, %v972
      %v974 = vpop.f32.mrf.mxu0
      %975 = vmatprep.mubr.bf16.mxu0 0
      %976 = vmatmul.mubr.bf16.gmra.mxu0 %v906
      %v977 = vpop.f32.mrf.mxu0
      %v978 = vadd.f32 %v875, %v977
      %v979 = vpop.f32.mrf.mxu0
      %v980 = vpop.f32.mrf.mxu0
      %v981 = vadd.f32 %v878, %v980
      %v982 = vpop.f32.mrf.mxu0
      %983 = vdwg.mxu0
      %v986 = vunpack.c.l.b16 %v507
      %v987 = vunpack.c.l.b16 %v508
      %v988 = vpack.c.b16 %v987, %v986
      %v990 = vshrl.u32 %v988, 16
      %v992 = vshll.u32 %v988, 16
      %v994 = vrot.slane %v992, 1
      %v995 = vor.u32 %v990, %v994
      %996 = vrot.lane.b32.xlu0 %v995, 4
      %v997 = vpop.permute.xlu0 %996
      %v998 = vrot.slane %v988, 1
      %999 = vrot.lane.b32.xlu0 %v998, 8
      %v1000 = vpop.permute.xlu0 %999
      %v1003 = vsel %vm679, %v507, %v997
      %v1005 = vsel %vm710, %v1003, %v1000
      %s1006 = scalar_lea.vmem %s1, 16
      %v1007 = vld [vmem:[%s1006] sm:$0xf]
      %v1008 = vld [vmem:[%s1006 + $0x4] sm:$0x3]
      %v1010 = vunpack.c.l.b16 %v1005
      %v1011 = vpack.c.b16 %v1010, %v777
      %v1014 = vunpack.c.l.b16 %v1007
      %v1015 = vunpack.c.l.b16 %v1008
      %v1016 = vpack.c.b16 %v1015, %v1014
      %v1018 = vsel %vm788, %v1011, 0
      %v1021 = vsel %vm804, %v1016, 0
      %1023 = vmatprep.subr.bf16.mxu0 0
      %1024 = vmatpush1.bf16.msra.mxu0 0
      %1025 = vmatprep.subr.bf16.mxu0 0
      %1026 = vmatpush1.bf16.msra.mxu0 0
      %1027 = vmatprep.subr.bf16.mxu0 0
      %1028 = vmatpush1.bf16.msra.mxu0 0
      %1029 = vmatprep.subr.bf16.mxu0 0
      %1030 = vmatpush1.bf16.msra.mxu0 0
      %1031 = vmatprep.subr.bf16.mxu0 0
      %1032 = vmatpush1.bf16.msra.mxu0 0
      %1033 = vmatprep.subr.bf16.mxu0 0
      %1034 = vmatpush1.bf16.msra.mxu0 0
      %1035 = vmatprep.subr.bf16.mxu0 0
      %1036 = vmatpush1.bf16.msra.mxu0 0
      %1037 = vmatprep.subr.bf16.mxu0 0
      %1038 = vmatpush1.bf16.msra.mxu0 %v1021
      %1039 = vmatprep.subr.bf16.mxu0 0
      %1040 = vmatpush2.bf16.msra.mxu0 0
      %1041 = vmatprep.subr.bf16.mxu0 0
      %1042 = vmatpush2.bf16.msra.mxu0 0
      %1043 = vmatprep.subr.bf16.mxu0 0
      %1044 = vmatpush2.bf16.msra.mxu0 0
      %1045 = vmatprep.subr.bf16.mxu0 0
      %1046 = vmatpush2.bf16.msra.mxu0 0
      %1047 = vmatprep.subr.bf16.mxu0 0
      %1048 = vmatpush2.bf16.msra.mxu0 0
      %1049 = vmatprep.subr.bf16.mxu0 0
      %1050 = vmatpush2.bf16.msra.mxu0 0
      %1051 = vmatprep.subr.bf16.mxu0 0
      %1052 = vmatpush2.bf16.msra.mxu0 0
      %1053 = vmatprep.subr.bf16.mxu0 0
      %1054 = vmatpush2.bf16.msra.mxu0 0
      %1055 = vmatprep.mubr.bf16.mxu0 0
      %1056 = vmatmul.mubr.bf16.gmra.mxu0 %v897
      %v1057 = vpop.f32.mrf.mxu0
      %v1058 = vadd.f32 0.0, %v1057
      %v1059 = vpop.f32.mrf.mxu0
      %v1060 = vpop.f32.mrf.mxu0
      %v1061 = vadd.f32 0.0, %v1060
      %v1062 = vpop.f32.mrf.mxu0
      %1063 = vmatprep.mubr.bf16.mxu0 0
      %1064 = vmatmul.mubr.bf16.gmra.mxu0 %v900
      %v1065 = vpop.f32.mrf.mxu0
      %v1066 = vadd.f32 0.0, %v1065
      %v1067 = vpop.f32.mrf.mxu0
      %v1068 = vpop.f32.mrf.mxu0
      %v1069 = vadd.f32 0.0, %v1068
      %v1070 = vpop.f32.mrf.mxu0
      %1071 = vmatprep.mubr.bf16.mxu0 0
      %1072 = vmatmul.mubr.bf16.gmra.mxu0 %v903
      %v1073 = vpop.f32.mrf.mxu0
      %v1074 = vadd.f32 0.0, %v1073
      %v1075 = vpop.f32.mrf.mxu0
      %v1076 = vpop.f32.mrf.mxu0
      %v1077 = vadd.f32 0.0, %v1076
      %v1078 = vpop.f32.mrf.mxu0
      %1079 = vmatprep.mubr.bf16.mxu0 0
      %1080 = vmatmul.mubr.bf16.gmra.mxu0 %v906
      %v1081 = vpop.f32.mrf.mxu0
      %v1082 = vadd.f32 0.0, %v1081
      %v1083 = vpop.f32.mrf.mxu0
      %v1084 = vpop.f32.mrf.mxu0
      %v1085 = vadd.f32 0.0, %v1084
      %v1086 = vpop.f32.mrf.mxu0
      %1087 = vmatprep.mubr.bf16.mxu0 0
      %1088 = vmatmul.mubr.bf16.gmra.mxu0 %v1018
      %v1089 = vpop.f32.mrf.mxu0
      %v1090 = vadd.f32 0.0, %v1089
      %v1091 = vpop.f32.mrf.mxu0
      %v1092 = vpop.f32.mrf.mxu0
      %v1093 = vadd.f32 0.0, %v1092
      %v1094 = vpop.f32.mrf.mxu0
      %1095 = vdwg.mxu0
      %v1096 = vadd.f32 %v946, %v1058
      %v1097 = vadd.f32 %v949, %v1061
      %v1098 = vadd.f32 %v954, %v1066
      %v1099 = vadd.f32 %v957, %v1069
      %v1100 = vadd.f32 %v962, %v1074
      %v1101 = vadd.f32 %v965, %v1077
      %v1102 = vadd.f32 %v970, %v1082
      %v1103 = vadd.f32 %v973, %v1085
      %v1104 = vadd.f32 %v978, %v1090
      %v1105 = vadd.f32 %v981, %v1093
      %v1106 = vld [vmem:[%s2] sm:$0x1]
      %v1108 = vlaneseq
      %v1109 = vshrl.u32 %v1108, 7
      %v1110 = vsub.s32 0, %v1109
      %v1111 = vrot.slane %v1106, %v1110
      %v1113 = vmul.f32 %v1096, %v1111
      %v1114 = vmul.f32 %v1097, %v1111
      %v1115 = vmul.f32 %v1098, %v1111
      %v1116 = vmul.f32 %v1099, %v1111
      %v1117 = vmul.f32 %v1100, %v1111
      %v1118 = vmul.f32 %v1101, %v1111
      %v1119 = vmul.f32 %v1102, %v1111
      %v1120 = vmul.f32 %v1103, %v1111
      %v1121 = vmul.f32 %v1104, %v1111
      %v1122 = vmul.f32 %v1105, %v1111
      %v1123 = vld [vmem:[%s3] sm:$0x1]
      %v1125 = vlaneseq
      %v1126 = vshrl.u32 %v1125, 7
      %v1127 = vsub.s32 0, %v1126
      %v1128 = vrot.slane %v1123, %v1127
      %v1130 = vadd.f32 %v1113, %v1128
      %v1131 = vadd.f32 %v1114, %v1128
      %v1132 = vadd.f32 %v1115, %v1128
      %v1133 = vadd.f32 %v1116, %v1128
      %v1134 = vadd.f32 %v1117, %v1128
      %v1135 = vadd.f32 %v1118, %v1128
      %v1136 = vadd.f32 %v1119, %v1128
      %v1137 = vadd.f32 %v1120, %v1128
      %v1138 = vadd.f32 %v1121, %v1128
      %v1139 = vadd.f32 %v1122, %v1128
      %v1140 = vmax.f32 %v1130, 0.0
      %v1141 = vmax.f32 %v1131, 0.0
      %v1142 = vmax.f32 %v1132, 0.0
      %v1143 = vmax.f32 %v1133, 0.0
      %v1144 = vmax.f32 %v1134, 0.0
      %v1145 = vmax.f32 %v1135, 0.0
      %v1146 = vmax.f32 %v1136, 0.0
      %v1147 = vmax.f32 %v1137, 0.0
      %v1148 = vmax.f32 %v1138, 0.0
      %v1149 = vmax.f32 %v1139, 0.0
      %s1150 = smul.u32 %s23, 8
      %s1151 = ssub.s32 %s1150, 1
      %v1152 = vstv %s1151
      %v1153 = vadd.s32 %v1152, 1
      %v1154 = vadd.s32 %v1152, 2
      %v1155 = vadd.s32 %v1152, 3
      %v1156 = vadd.s32 %v1152, 4
      %v1157 = vadd.s32 %v1152, 5
      %v1158 = vadd.s32 %v1152, 6
      %v1159 = vadd.s32 %v1152, 7
      %v1160 = vadd.s32 %v1152, 8
      %v1161 = vadd.s32 %v1152, 9
      %vm1162 = vcmp.ge.s32.totalorder %v1152, 0
      %vm1163 = vcmp.ge.s32.totalorder %v1153, 0
      %vm1164 = vcmp.ge.s32.totalorder %v1154, 0
      %vm1165 = vcmp.ge.s32.totalorder %v1155, 0
      %vm1166 = vcmp.ge.s32.totalorder %v1156, 0
      %vm1167 = vcmp.ge.s32.totalorder %v1157, 0
      %vm1168 = vcmp.ge.s32.totalorder %v1158, 0
      %vm1169 = vcmp.ge.s32.totalorder %v1159, 0
      %vm1170 = vcmp.ge.s32.totalorder %v1160, 0
      %vm1171 = vcmp.ge.s32.totalorder %v1161, 0
      %vm1172 = vcmp.lt.s32.totalorder %v1152, 8
      %vm1173 = vcmp.lt.s32.totalorder %v1153, 8
      %vm1174 = vcmp.lt.s32.totalorder %v1154, 8
      %vm1175 = vcmp.lt.s32.totalorder %v1155, 8
      %vm1176 = vcmp.lt.s32.totalorder %v1156, 8
      %vm1177 = vcmp.lt.s32.totalorder %v1157, 8
      %vm1178 = vcmp.lt.s32.totalorder %v1158, 8
      %vm1179 = vcmp.lt.s32.totalorder %v1159, 8
      %vm1180 = vcmp.lt.s32.totalorder %v1160, 8
      %vm1181 = vcmp.lt.s32.totalorder %v1161, 8
      %vm1182 = vmand %vm1162, %vm1172
      %vm1183 = vmand %vm1163, %vm1173
      %vm1184 = vmand %vm1164, %vm1174
      %vm1185 = vmand %vm1165, %vm1175
      %vm1186 = vmand %vm1166, %vm1176
      %vm1187 = vmand %vm1167, %vm1177
      %vm1188 = vmand %vm1168, %vm1178
      %vm1189 = vmand %vm1169, %vm1179
      %vm1190 = vmand %vm1170, %vm1180
      %vm1191 = vmand %vm1171, %vm1181
      %v1192 = vsel %vm1182, 1, 0
      %v1193 = vsel %vm1183, 1, 0
      %v1194 = vsel %vm1184, 1, 0
      %v1195 = vsel %vm1185, 1, 0
      %v1196 = vsel %vm1186, 1, 0
      %v1197 = vsel %vm1187, 1, 0
      %v1198 = vsel %vm1188, 1, 0
      %v1199 = vsel %vm1189, 1, 0
      %v1200 = vsel %vm1190, 1, 0
      %v1201 = vsel %vm1191, 1, 0
      %vm1202 = vcmp.eq.s32.totalorder %v1192, 1
      %vm1203 = vcmp.eq.s32.totalorder %v1193, 1
      %vm1204 = vcmp.eq.s32.totalorder %v1194, 1
      %vm1205 = vcmp.eq.s32.totalorder %v1195, 1
      %vm1206 = vcmp.eq.s32.totalorder %v1196, 1
      %vm1207 = vcmp.eq.s32.totalorder %v1197, 1
      %vm1208 = vcmp.eq.s32.totalorder %v1198, 1
      %vm1209 = vcmp.eq.s32.totalorder %v1199, 1
      %vm1210 = vcmp.eq.s32.totalorder %v1200, 1
      %vm1211 = vcmp.eq.s32.totalorder %v1201, 1
      %v1212 = vsel %vm1202, %v1140, 0.0
      %v1213 = vsel %vm1203, %v1141, 0.0
      %v1214 = vsel %vm1204, %v1142, 0.0
      %v1215 = vsel %vm1205, %v1143, 0.0
      %v1216 = vsel %vm1206, %v1144, 0.0
      %v1217 = vsel %vm1207, %v1145, 0.0
      %v1218 = vsel %vm1208, %v1146, 0.0
      %v1219 = vsel %vm1209, %v1147, 0.0
      %v1220 = vsel %vm1210, %v1148, 0.0
      %v1221 = vsel %vm1211, %v1149, 0.0
      %v1222 = vpack.c.bf16 %v1212, %v1212
      %v1223 = vpack.c.bf16 %v1213, %v1213
      %v1224 = vpack.c.bf16 %v1214, %v1214
      %v1225 = vpack.c.bf16 %v1215, %v1215
      %v1226 = vpack.c.bf16 %v1216, %v1216
      %v1227 = vpack.c.bf16 %v1217, %v1217
      %v1228 = vpack.c.bf16 %v1218, %v1218
      %v1229 = vpack.c.bf16 %v1219, %v1219
      %v1230 = vpack.c.bf16 %v1220, %v1220
      %v1231 = vpack.c.bf16 %v1221, %v1221
      %v1233 = vshrl.u32 %v1222, 16
      %v1235 = vrot.slane %v1233, 7
      %v1236 = vshll.u32 %v1222, 16
      %v1238 = vor.u32 %v1235, %v1236
      %v1240 = vshrl.u32 %v1223, 16
      %v1242 = vrot.slane %v1240, 7
      %v1243 = vshll.u32 %v1223, 16
      %v1245 = vor.u32 %v1242, %v1243
      %v1247 = vshrl.u32 %v1224, 16
      %v1249 = vrot.slane %v1247, 7
      %v1250 = vshll.u32 %v1224, 16
      %v1252 = vor.u32 %v1249, %v1250
      %v1254 = vshrl.u32 %v1225, 16
      %v1256 = vrot.slane %v1254, 7
      %v1257 = vshll.u32 %v1225, 16
      %v1259 = vor.u32 %v1256, %v1257
      %v1261 = vshrl.u32 %v1226, 16
      %v1263 = vrot.slane %v1261, 7
      %v1264 = vshll.u32 %v1226, 16
      %v1266 = vor.u32 %v1263, %v1264
      %v1268 = vshrl.u32 %v1227, 16
      %v1270 = vrot.slane %v1268, 7
      %v1271 = vshll.u32 %v1227, 16
      %v1273 = vor.u32 %v1270, %v1271
      %v1275 = vshrl.u32 %v1228, 16
      %v1277 = vrot.slane %v1275, 7
      %v1278 = vshll.u32 %v1228, 16
      %v1280 = vor.u32 %v1277, %v1278
      %v1282 = vshrl.u32 %v1229, 16
      %v1284 = vrot.slane %v1282, 7
      %v1285 = vshll.u32 %v1229, 16
      %v1287 = vor.u32 %v1284, %v1285
      %v1289 = vshrl.u32 %v1230, 16
      %v1291 = vrot.slane %v1289, 7
      %v1292 = vshll.u32 %v1230, 16
      %v1294 = vor.u32 %v1291, %v1292
      %v1296 = vshrl.u32 %v1231, 16
      %v1298 = vrot.slane %v1296, 7
      %v1299 = vshll.u32 %v1231, 16
      %v1301 = vor.u32 %v1298, %v1299
      %vm1312 = vcmask 1040384
      %vm1313 = vsmask.f32 256
      %vm1314 = vmand %vm1312, %vm1313
      %v1315 = vsel %vm1314, 0, %v1238
      %v1316 = vsel %vm1314, 0, %v1245
      %v1317 = vsel %vm1314, 0, %v1252
      %v1318 = vsel %vm1314, 0, %v1259
      %v1319 = vsel %vm1314, 0, %v1266
      %v1320 = vsel %vm1314, 0, %v1273
      %v1321 = vsel %vm1314, 0, %v1280
      %v1322 = vsel %vm1314, 0, %v1287
      %v1323 = vsel %vm1314, 0, %v1294
      %v1324 = vsel %vm1314, 0, %v1301
      %vm1325 = vcmask 1044480
      %vm1326 = vsmask.f32 4352
      %vm1327 = vmand %vm1325, %vm1326
      %v1328 = vsel %vm1327, %v1315, 0
      %v1329 = vsel %vm1327, %v1316, 0
      %v1330 = vsel %vm1327, %v1317, 0
      %v1331 = vsel %vm1327, %v1318, 0
      %v1332 = vsel %vm1327, %v1319, 0
      %v1333 = vsel %vm1327, %v1320, 0
      %v1334 = vsel %vm1327, %v1321, 0
      %v1335 = vsel %vm1327, %v1322, 0
      %v1336 = vsel %vm1327, %v1323, 0
      %v1337 = vsel %vm1327, %v1324, 0
      %v1339 = vshrl.u32 %v1328, 16
      %v1341 = vshll.u32 %v1328, 16
      %v1343 = vrot.slane %v1341, 1
      %v1344 = vor.u32 %v1339, %v1343
      %v1346 = vshrl.u32 %v1329, 16
      %v1348 = vshll.u32 %v1329, 16
      %v1350 = vrot.slane %v1348, 1
      %v1351 = vor.u32 %v1346, %v1350
      %v1353 = vshrl.u32 %v1330, 16
      %v1355 = vshll.u32 %v1330, 16
      %v1357 = vrot.slane %v1355, 1
      %v1358 = vor.u32 %v1353, %v1357
      %v1360 = vshrl.u32 %v1331, 16
      %v1362 = vshll.u32 %v1331, 16
      %v1364 = vrot.slane %v1362, 1
      %v1365 = vor.u32 %v1360, %v1364
      %v1367 = vshrl.u32 %v1332, 16
      %v1369 = vshll.u32 %v1332, 16
      %v1371 = vrot.slane %v1369, 1
      %v1372 = vor.u32 %v1367, %v1371
      %v1374 = vshrl.u32 %v1333, 16
      %v1376 = vshll.u32 %v1333, 16
      %v1378 = vrot.slane %v1376, 1
      %v1379 = vor.u32 %v1374, %v1378
      %v1381 = vshrl.u32 %v1334, 16
      %v1383 = vshll.u32 %v1334, 16
      %v1385 = vrot.slane %v1383, 1
      %v1386 = vor.u32 %v1381, %v1385
      %v1388 = vshrl.u32 %v1335, 16
      %v1390 = vshll.u32 %v1335, 16
      %v1392 = vrot.slane %v1390, 1
      %v1393 = vor.u32 %v1388, %v1392
      %v1402 = vrot.slane %v1328, 1
      %v1403 = vrot.slane %v1329, 1
      %v1404 = vrot.slane %v1330, 1
      %v1405 = vrot.slane %v1331, 1
      %v1406 = vrot.slane %v1332, 1
      %v1407 = vrot.slane %v1333, 1
      %v1408 = vrot.slane %v1334, 1
      %v1409 = vrot.slane %v1335, 1
      %v1410 = vld [vmem:[%s4] sm:$0xf]
      %v1411 = vld [vmem:[%s4 + $0x4] sm:$0xf]
      %v1412 = vld [vmem:[%s4 + $0x8] sm:$0xf]
      %v1413 = vld [vmem:[%s4 + $0xc] sm:$0xf]
      %v1414 = vld [vmem:[%s4 + $0x10] sm:$0xf]
      %v1415 = vld [vmem:[%s4 + $0x14] sm:$0xf]
      %v1416 = vld [vmem:[%s4 + $0x18] sm:$0xf]
      %v1417 = vld [vmem:[%s4 + $0x1c] sm:$0xf]
      %v1418 = vld [vmem:[%s4 + $0x20] sm:$0xf]
      %v1419 = vld [vmem:[%s4 + $0x24] sm:$0xf]
      %v1420 = vld [vmem:[%s4 + $0x28] sm:$0xf]
      %v1421 = vld [vmem:[%s4 + $0x2c] sm:$0xf]
      %v1422 = vld [vmem:[%s4 + $0x30] sm:$0xf]
      %v1423 = vld [vmem:[%s4 + $0x34] sm:$0xf]
      %v1424 = vld [vmem:[%s4 + $0x38] sm:$0xf]
      %v1425 = vld [vmem:[%s4 + $0x3c] sm:$0xf]
      %v1426 = vld [vmem:[%s4 + $0x40] sm:$0xf]
      %v1427 = vld [vmem:[%s4 + $0x44] sm:$0xf]
      %v1428 = vld [vmem:[%s4 + $0x48] sm:$0xf]
      %v1429 = vld [vmem:[%s4 + $0x4c] sm:$0xf]
      %v1430 = vld [vmem:[%s4 + $0x50] sm:$0xf]
      %v1431 = vld [vmem:[%s4 + $0x54] sm:$0xf]
      %v1432 = vld [vmem:[%s4 + $0x58] sm:$0xf]
      %v1433 = vld [vmem:[%s4 + $0x5c] sm:$0xf]
      %v1434 = vld [vmem:[%s4 + $0x60] sm:$0xf]
      %v1435 = vld [vmem:[%s4 + $0x64] sm:$0xf]
      %v1436 = vld [vmem:[%s4 + $0x68] sm:$0xf]
      %v1437 = vld [vmem:[%s4 + $0x6c] sm:$0xf]
      %v1438 = vld [vmem:[%s4 + $0x70] sm:$0xf]
      %v1439 = vld [vmem:[%s4 + $0x74] sm:$0xf]
      %v1440 = vld [vmem:[%s4 + $0x78] sm:$0xf]
      %v1441 = vld [vmem:[%s4 + $0x7c] sm:$0xf]
      %v1442 = vld [vmem:[%s4 + $0x80] sm:$0xf]
      %v1443 = vld [vmem:[%s4 + $0x84] sm:$0xf]
      %v1444 = vld [vmem:[%s4 + $0x88] sm:$0xf]
      %v1445 = vld [vmem:[%s4 + $0x8c] sm:$0xf]
      %v1446 = vld [vmem:[%s4 + $0x90] sm:$0xf]
      %v1447 = vld [vmem:[%s4 + $0x94] sm:$0xf]
      %v1448 = vld [vmem:[%s4 + $0x98] sm:$0xf]
      %v1449 = vld [vmem:[%s4 + $0x9c] sm:$0xf]
      %v1450 = vld [vmem:[%s4 + $0xa0] sm:$0xf]
      %v1451 = vld [vmem:[%s4 + $0xa4] sm:$0xf]
      %v1452 = vld [vmem:[%s4 + $0xa8] sm:$0xf]
      %v1453 = vld [vmem:[%s4 + $0xac] sm:$0xf]
      %v1454 = vld [vmem:[%s4 + $0xb0] sm:$0xf]
      %v1455 = vld [vmem:[%s4 + $0xb4] sm:$0xf]
      %v1456 = vld [vmem:[%s4 + $0xb8] sm:$0xf]
      %v1457 = vld [vmem:[%s4 + $0xbc] sm:$0xf]
      %v1459 = vshrl.u32 %v1336, 16
      %v1461 = vshll.u32 %v1336, 16
      %v1463 = vrot.slane %v1461, 1
      %v1464 = vor.u32 %v1459, %v1463
      %v1466 = vrot.slane %v1336, 1
      %s1467 = scalar_lea.vmem %s4, 192
      %v1468 = vld [vmem:[%s1467] sm:$0xf]
      %v1469 = vld [vmem:[%s1467 + $0x4] sm:$0xf]
      %v1470 = vld [vmem:[%s1467 + $0x8] sm:$0xf]
      %v1471 = vld [vmem:[%s1467 + $0xc] sm:$0xf]
      %v1472 = vld [vmem:[%s1467 + $0x10] sm:$0xf]
      %v1473 = vld [vmem:[%s1467 + $0x14] sm:$0xf]
      %v1474 = vld [vmem:[%s1467 + $0x18] sm:$0xf]
      %v1475 = vld [vmem:[%s1467 + $0x1c] sm:$0xf]
      %v1476 = vld [vmem:[%s1467 + $0x20] sm:$0xf]
      %v1477 = vld [vmem:[%s1467 + $0x24] sm:$0xf]
      %v1478 = vld [vmem:[%s1467 + $0x28] sm:$0xf]
      %v1479 = vld [vmem:[%s1467 + $0x2c] sm:$0xf]
      %v1480 = vld [vmem:[%s1467 + $0x30] sm:$0xf]
      %v1481 = vld [vmem:[%s1467 + $0x34] sm:$0xf]
      %v1482 = vld [vmem:[%s1467 + $0x38] sm:$0xf]
      %v1483 = vld [vmem:[%s1467 + $0x3c] sm:$0xf]
      %v1484 = vld [vmem:[%s1467 + $0x40] sm:$0xf]
      %v1485 = vld [vmem:[%s1467 + $0x44] sm:$0xf]
      %v1486 = vld [vmem:[%s1467 + $0x48] sm:$0xf]
      %v1487 = vld [vmem:[%s1467 + $0x4c] sm:$0xf]
      %v1488 = vld [vmem:[%s1467 + $0x50] sm:$0xf]
      %v1489 = vld [vmem:[%s1467 + $0x54] sm:$0xf]
      %v1490 = vld [vmem:[%s1467 + $0x58] sm:$0xf]
      %v1491 = vld [vmem:[%s1467 + $0x5c] sm:$0xf]
      %v1492 = vld [vmem:[%s1467 + $0x60] sm:$0xf]
      %v1493 = vld [vmem:[%s1467 + $0x64] sm:$0xf]
      %v1494 = vld [vmem:[%s1467 + $0x68] sm:$0xf]
      %v1495 = vld [vmem:[%s1467 + $0x6c] sm:$0xf]
      %v1496 = vld [vmem:[%s1467 + $0x70] sm:$0xf]
      %v1497 = vld [vmem:[%s1467 + $0x74] sm:$0xf]
      %v1498 = vld [vmem:[%s1467 + $0x78] sm:$0xf]
      %v1499 = vld [vmem:[%s1467 + $0x7c] sm:$0xf]
      %v1500 = vld [vmem:[%s1467 + $0x80] sm:$0xf]
      %v1501 = vld [vmem:[%s1467 + $0x84] sm:$0xf]
      %v1502 = vld [vmem:[%s1467 + $0x88] sm:$0xf]
      %v1503 = vld [vmem:[%s1467 + $0x8c] sm:$0xf]
      %v1504 = vld [vmem:[%s1467 + $0x90] sm:$0xf]
      %v1505 = vld [vmem:[%s1467 + $0x94] sm:$0xf]
      %v1506 = vld [vmem:[%s1467 + $0x98] sm:$0xf]
      %v1507 = vld [vmem:[%s1467 + $0x9c] sm:$0xf]
      %v1508 = vld [vmem:[%s1467 + $0xa0] sm:$0xf]
      %v1509 = vld [vmem:[%s1467 + $0xa4] sm:$0xf]
      %v1510 = vld [vmem:[%s1467 + $0xa8] sm:$0xf]
      %v1511 = vld [vmem:[%s1467 + $0xac] sm:$0xf]
      %v1512 = vld [vmem:[%s1467 + $0xb0] sm:$0xf]
      %v1513 = vld [vmem:[%s1467 + $0xb4] sm:$0xf]
      %v1514 = vld [vmem:[%s1467 + $0xb8] sm:$0xf]
      %v1515 = vld [vmem:[%s1467 + $0xbc] sm:$0xf]
      %v1516 = vunpack.c.l.b16 %v1329
      %v1517 = vunpack.c.l.b16 %v1351
      %v1518 = vunpack.c.l.b16 %v1403
      %v1519 = vunpack.c.l.b16 %v1330
      %v1520 = vunpack.c.l.b16 %v1358
      %v1521 = vunpack.c.l.b16 %v1404
      %v1522 = vunpack.c.l.b16 %v1331
      %v1523 = vunpack.c.l.b16 %v1365
      %v1524 = vunpack.c.l.b16 %v1405
      %v1525 = vunpack.c.l.b16 %v1332
      %v1526 = vunpack.c.l.b16 %v1372
      %v1527 = vunpack.c.l.b16 %v1406
      %v1528 = vunpack.c.l.b16 %v1333
      %v1529 = vunpack.c.l.b16 %v1379
      %v1530 = vunpack.c.l.b16 %v1407
      %v1531 = vunpack.c.l.b16 %v1334
      %v1532 = vunpack.c.l.b16 %v1386
      %v1533 = vunpack.c.l.b16 %v1408
      %v1534 = vunpack.c.l.b16 %v1335
      %v1535 = vunpack.c.l.b16 %v1393
      %v1536 = vunpack.c.l.b16 %v1409
      %v1537 = vunpack.c.l.b16 %v1336
      %v1538 = vunpack.c.l.b16 %v1464
      %v1539 = vunpack.c.l.b16 %v1466
      %v1540 = vpack.c.b16 %v1519, %v1516
      %v1541 = vpack.c.b16 %v1520, %v1517
      %v1542 = vpack.c.b16 %v1521, %v1518
      %v1543 = vpack.c.b16 %v1525, %v1522
      %v1544 = vpack.c.b16 %v1526, %v1523
      %v1545 = vpack.c.b16 %v1527, %v1524
      %v1546 = vpack.c.b16 %v1531, %v1528
      %v1547 = vpack.c.b16 %v1532, %v1529
      %v1548 = vpack.c.b16 %v1533, %v1530
      %v1549 = vpack.c.b16 %v1537, %v1534
      %v1550 = vpack.c.b16 %v1538, %v1535
      %v1551 = vpack.c.b16 %v1539, %v1536
      %v1612 = vunpack.c.l.b16 %v1468
      %v1613 = vunpack.c.l.b16 %v1469
      %v1614 = vunpack.c.l.b16 %v1470
      %v1615 = vunpack.c.l.b16 %v1471
      %v1616 = vunpack.c.l.b16 %v1472
      %v1617 = vunpack.c.l.b16 %v1473
      %v1618 = vunpack.c.l.b16 %v1474
      %v1619 = vunpack.c.l.b16 %v1475
      %v1620 = vunpack.c.l.b16 %v1476
      %v1621 = vunpack.c.l.b16 %v1477
      %v1622 = vunpack.c.l.b16 %v1478
      %v1623 = vunpack.c.l.b16 %v1479
      %v1624 = vunpack.c.l.b16 %v1480
      %v1625 = vunpack.c.l.b16 %v1481
      %v1626 = vunpack.c.l.b16 %v1482
      %v1627 = vunpack.c.l.b16 %v1483
      %v1628 = vunpack.c.l.b16 %v1484
      %v1629 = vunpack.c.l.b16 %v1485
      %v1630 = vunpack.c.l.b16 %v1486
      %v1631 = vunpack.c.l.b16 %v1487
      %v1632 = vunpack.c.l.b16 %v1488
      %v1633 = vunpack.c.l.b16 %v1489
      %v1634 = vunpack.c.l.b16 %v1490
      %v1635 = vunpack.c.l.b16 %v1491
      %v1636 = vunpack.c.l.b16 %v1492
      %v1637 = vunpack.c.l.b16 %v1493
      %v1638 = vunpack.c.l.b16 %v1494
      %v1639 = vunpack.c.l.b16 %v1495
      %v1640 = vunpack.c.l.b16 %v1496
      %v1641 = vunpack.c.l.b16 %v1497
      %v1642 = vunpack.c.l.b16 %v1498
      %v1643 = vunpack.c.l.b16 %v1499
      %v1644 = vunpack.c.l.b16 %v1500
      %v1645 = vunpack.c.l.b16 %v1501
      %v1646 = vunpack.c.l.b16 %v1502
      %v1647 = vunpack.c.l.b16 %v1503
      %v1648 = vunpack.c.l.b16 %v1504
      %v1649 = vunpack.c.l.b16 %v1505
      %v1650 = vunpack.c.l.b16 %v1506
      %v1651 = vunpack.c.l.b16 %v1507
      %v1652 = vunpack.c.l.b16 %v1508
      %v1653 = vunpack.c.l.b16 %v1509
      %v1654 = vunpack.c.l.b16 %v1510
      %v1655 = vunpack.c.l.b16 %v1511
      %v1656 = vunpack.c.l.b16 %v1512
      %v1657 = vunpack.c.l.b16 %v1513
      %v1658 = vunpack.c.l.b16 %v1514
      %v1659 = vunpack.c.l.b16 %v1515
      %v1660 = vpack.c.b16 %v1613, %v1612
      %v1661 = vpack.c.b16 %v1615, %v1614
      %v1662 = vpack.c.b16 %v1617, %v1616
      %v1663 = vpack.c.b16 %v1619, %v1618
      %v1664 = vpack.c.b16 %v1621, %v1620
      %v1665 = vpack.c.b16 %v1623, %v1622
      %v1666 = vpack.c.b16 %v1625, %v1624
      %v1667 = vpack.c.b16 %v1627, %v1626
      %v1668 = vpack.c.b16 %v1629, %v1628
      %v1669 = vpack.c.b16 %v1631, %v1630
      %v1670 = vpack.c.b16 %v1633, %v1632
      %v1671 = vpack.c.b16 %v1635, %v1634
      %v1672 = vpack.c.b16 %v1637, %v1636
      %v1673 = vpack.c.b16 %v1639, %v1638
      %v1674 = vpack.c.b16 %v1641, %v1640
      %v1675 = vpack.c.b16 %v1643, %v1642
      %v1676 = vpack.c.b16 %v1645, %v1644
      %v1677 = vpack.c.b16 %v1647, %v1646
      %v1678 = vpack.c.b16 %v1649, %v1648
      %v1679 = vpack.c.b16 %v1651, %v1650
      %v1680 = vpack.c.b16 %v1653, %v1652
      %v1681 = vpack.c.b16 %v1655, %v1654
      %v1682 = vpack.c.b16 %v1657, %v1656
      %v1683 = vpack.c.b16 %v1659, %v1658
      %1708 = vmatprep.subr.bf16.mxu0 0
      %1709 = vmatpush1.bf16.msra.mxu0 %v1667
      %1710 = vmatprep.subr.bf16.mxu0 0
      %1711 = vmatpush1.bf16.msra.mxu0 %v1666
      %1712 = vmatprep.subr.bf16.mxu0 0
      %1713 = vmatpush1.bf16.msra.mxu0 %v1665
      %1714 = vmatprep.subr.bf16.mxu0 0
      %1715 = vmatpush1.bf16.msra.mxu0 %v1664
      %1716 = vmatprep.subr.bf16.mxu0 0
      %1717 = vmatpush1.bf16.msra.mxu0 %v1663
      %1718 = vmatprep.subr.bf16.mxu0 0
      %1719 = vmatpush1.bf16.msra.mxu0 %v1662
      %1720 = vmatprep.subr.bf16.mxu0 0
      %1721 = vmatpush1.bf16.msra.mxu0 %v1661
      %1722 = vmatprep.subr.bf16.mxu0 0
      %1723 = vmatpush1.bf16.msra.mxu0 %v1660
      %1724 = vmatprep.subr.bf16.mxu0 0
      %1725 = vmatpush2.bf16.msra.mxu0 %v1675
      %1726 = vmatprep.subr.bf16.mxu0 0
      %1727 = vmatpush2.bf16.msra.mxu0 %v1674
      %1728 = vmatprep.subr.bf16.mxu0 0
      %1729 = vmatpush2.bf16.msra.mxu0 %v1673
      %1730 = vmatprep.subr.bf16.mxu0 0
      %1731 = vmatpush2.bf16.msra.mxu0 %v1672
      %1732 = vmatprep.subr.bf16.mxu0 0
      %1733 = vmatpush2.bf16.msra.mxu0 %v1671
      %1734 = vmatprep.subr.bf16.mxu0 0
      %1735 = vmatpush2.bf16.msra.mxu0 %v1670
      %1736 = vmatprep.subr.bf16.mxu0 0
      %1737 = vmatpush2.bf16.msra.mxu0 %v1669
      %1738 = vmatprep.subr.bf16.mxu0 0
      %1739 = vmatpush2.bf16.msra.mxu0 %v1668
      %1740 = vmatprep.mubr.bf16.mxu0 %v1541
      %1741 = vmatmul.mubr.bf16.gmra.mxu0 %v1540
      %v1742 = vpop.f32.mrf.mxu0
      %v1743 = vadd.f32 0.0, %v1742
      %v1744 = vpop.f32.mrf.mxu0
      %v1745 = vpop.f32.mrf.mxu0
      %v1746 = vadd.f32 0.0, %v1745
      %v1747 = vpop.f32.mrf.mxu0
      %1748 = vmatprep.mubr.bf16.mxu0 %v1544
      %1749 = vmatmul.mubr.bf16.gmra.mxu0 %v1543
      %v1750 = vpop.f32.mrf.mxu0
      %v1751 = vadd.f32 0.0, %v1750
      %v1752 = vpop.f32.mrf.mxu0
      %v1753 = vpop.f32.mrf.mxu0
      %v1754 = vadd.f32 0.0, %v1753
      %v1755 = vpop.f32.mrf.mxu0
      %1756 = vmatprep.mubr.bf16.mxu0 %v1547
      %1757 = vmatmul.mubr.bf16.gmra.mxu0 %v1546
      %v1758 = vpop.f32.mrf.mxu0
      %v1759 = vadd.f32 0.0, %v1758
      %v1760 = vpop.f32.mrf.mxu0
      %v1761 = vpop.f32.mrf.mxu0
      %v1762 = vadd.f32 0.0, %v1761
      %v1763 = vpop.f32.mrf.mxu0
      %1764 = vmatprep.mubr.bf16.mxu0 %v1550
      %1765 = vmatmul.mubr.bf16.gmra.mxu0 %v1549
      %v1766 = vpop.f32.mrf.mxu0
      %v1767 = vadd.f32 0.0, %v1766
      %v1768 = vpop.f32.mrf.mxu0
      %v1769 = vpop.f32.mrf.mxu0
      %v1770 = vadd.f32 0.0, %v1769
      %v1771 = vpop.f32.mrf.mxu0
      %1772 = vdwg.mxu0
      %1773 = vmatprep.subr.bf16.mxu0 0
      %1774 = vmatpush1.bf16.msra.mxu0 %v1683
      %1775 = vmatprep.subr.bf16.mxu0 0
      %1776 = vmatpush1.bf16.msra.mxu0 %v1682
      %1777 = vmatprep.subr.bf16.mxu0 0
      %1778 = vmatpush1.bf16.msra.mxu0 %v1681
      %1779 = vmatprep.subr.bf16.mxu0 0
      %1780 = vmatpush1.bf16.msra.mxu0 %v1680
      %1781 = vmatprep.subr.bf16.mxu0 0
      %1782 = vmatpush1.bf16.msra.mxu0 %v1679
      %1783 = vmatprep.subr.bf16.mxu0 0
      %1784 = vmatpush1.bf16.msra.mxu0 %v1678
      %1785 = vmatprep.subr.bf16.mxu0 0
      %1786 = vmatpush1.bf16.msra.mxu0 %v1677
      %1787 = vmatprep.subr.bf16.mxu0 0
      %1788 = vmatpush1.bf16.msra.mxu0 %v1676
      %1789 = vmatprep.subr.bf16.mxu0 0
      %1790 = vmatpush2.bf16.msra.mxu0 0
      %1791 = vmatprep.subr.bf16.mxu0 0
      %1792 = vmatpush2.bf16.msra.mxu0 0
      %1793 = vmatprep.subr.bf16.mxu0 0
      %1794 = vmatpush2.bf16.msra.mxu0 0
      %1795 = vmatprep.subr.bf16.mxu0 0
      %1796 = vmatpush2.bf16.msra.mxu0 0
      %1797 = vmatprep.subr.bf16.mxu0 0
      %1798 = vmatpush2.bf16.msra.mxu0 0
      %1799 = vmatprep.subr.bf16.mxu0 0
      %1800 = vmatpush2.bf16.msra.mxu0 0
      %1801 = vmatprep.subr.bf16.mxu0 0
      %1802 = vmatpush2.bf16.msra.mxu0 0
      %1803 = vmatprep.subr.bf16.mxu0 0
      %1804 = vmatpush2.bf16.msra.mxu0 0
      %1805 = vmatprep.mubr.bf16.mxu0 0
      %1806 = vmatmul.mubr.bf16.gmra.mxu0 %v1542
      %v1807 = vpop.f32.mrf.mxu0
      %v1808 = vadd.f32 %v1743, %v1807
      %v1809 = vpop.f32.mrf.mxu0
      %v1810 = vpop.f32.mrf.mxu0
      %v1811 = vadd.f32 %v1746, %v1810
      %v1812 = vpop.f32.mrf.mxu0
      %1813 = vmatprep.mubr.bf16.mxu0 0
      %1814 = vmatmul.mubr.bf16.gmra.mxu0 %v1545
      %v1815 = vpop.f32.mrf.mxu0
      %v1816 = vadd.f32 %v1751, %v1815
      %v1817 = vpop.f32.mrf.mxu0
      %v1818 = vpop.f32.mrf.mxu0
      %v1819 = vadd.f32 %v1754, %v1818
      %v1820 = vpop.f32.mrf.mxu0
      %1821 = vmatprep.mubr.bf16.mxu0 0
      %1822 = vmatmul.mubr.bf16.gmra.mxu0 %v1548
      %v1823 = vpop.f32.mrf.mxu0
      %v1824 = vadd.f32 %v1759, %v1823
      %v1825 = vpop.f32.mrf.mxu0
      %v1826 = vpop.f32.mrf.mxu0
      %v1827 = vadd.f32 %v1762, %v1826
      %v1828 = vpop.f32.mrf.mxu0
      %1829 = vmatprep.mubr.bf16.mxu0 0
      %1830 = vmatmul.mubr.bf16.gmra.mxu0 %v1551
      %v1831 = vpop.f32.mrf.mxu0
      %v1832 = vadd.f32 %v1767, %v1831
      %v1833 = vpop.f32.mrf.mxu0
      %v1834 = vpop.f32.mrf.mxu0
      %v1835 = vadd.f32 %v1770, %v1834
      %v1836 = vpop.f32.mrf.mxu0
      %1837 = vdwg.mxu0
      %v1838 = vunpack.c.l.b16 %v1328
      %v1839 = vunpack.c.l.b16 %v1344
      %v1840 = vunpack.c.l.b16 %v1402
      %v1841 = vpack.c.b16 %v1516, %v1838
      %v1842 = vpack.c.b16 %v1517, %v1839
      %v1843 = vpack.c.b16 %v1518, %v1840
      %v1844 = vpack.c.b16 %v1522, %v1519
      %v1845 = vpack.c.b16 %v1523, %v1520
      %v1846 = vpack.c.b16 %v1524, %v1521
      %v1847 = vpack.c.b16 %v1528, %v1525
      %v1848 = vpack.c.b16 %v1529, %v1526
      %v1849 = vpack.c.b16 %v1530, %v1527
      %v1850 = vpack.c.b16 %v1534, %v1531
      %v1851 = vpack.c.b16 %v1535, %v1532
      %v1852 = vpack.c.b16 %v1536, %v1533
      %v1913 = vunpack.c.l.b16 %v1410
      %v1914 = vunpack.c.l.b16 %v1411
      %v1915 = vunpack.c.l.b16 %v1412
      %v1916 = vunpack.c.l.b16 %v1413
      %v1917 = vunpack.c.l.b16 %v1414
      %v1918 = vunpack.c.l.b16 %v1415
      %v1919 = vunpack.c.l.b16 %v1416
      %v1920 = vunpack.c.l.b16 %v1417
      %v1921 = vunpack.c.l.b16 %v1418
      %v1922 = vunpack.c.l.b16 %v1419
      %v1923 = vunpack.c.l.b16 %v1420
      %v1924 = vunpack.c.l.b16 %v1421
      %v1925 = vunpack.c.l.b16 %v1422
      %v1926 = vunpack.c.l.b16 %v1423
      %v1927 = vunpack.c.l.b16 %v1424
      %v1928 = vunpack.c.l.b16 %v1425
      %v1929 = vunpack.c.l.b16 %v1426
      %v1930 = vunpack.c.l.b16 %v1427
      %v1931 = vunpack.c.l.b16 %v1428
      %v1932 = vunpack.c.l.b16 %v1429
      %v1933 = vunpack.c.l.b16 %v1430
      %v1934 = vunpack.c.l.b16 %v1431
      %v1935 = vunpack.c.l.b16 %v1432
      %v1936 = vunpack.c.l.b16 %v1433
      %v1937 = vunpack.c.l.b16 %v1434
      %v1938 = vunpack.c.l.b16 %v1435
      %v1939 = vunpack.c.l.b16 %v1436
      %v1940 = vunpack.c.l.b16 %v1437
      %v1941 = vunpack.c.l.b16 %v1438
      %v1942 = vunpack.c.l.b16 %v1439
      %v1943 = vunpack.c.l.b16 %v1440
      %v1944 = vunpack.c.l.b16 %v1441
      %v1945 = vunpack.c.l.b16 %v1442
      %v1946 = vunpack.c.l.b16 %v1443
      %v1947 = vunpack.c.l.b16 %v1444
      %v1948 = vunpack.c.l.b16 %v1445
      %v1949 = vunpack.c.l.b16 %v1446
      %v1950 = vunpack.c.l.b16 %v1447
      %v1951 = vunpack.c.l.b16 %v1448
      %v1952 = vunpack.c.l.b16 %v1449
      %v1953 = vunpack.c.l.b16 %v1450
      %v1954 = vunpack.c.l.b16 %v1451
      %v1955 = vunpack.c.l.b16 %v1452
      %v1956 = vunpack.c.l.b16 %v1453
      %v1957 = vunpack.c.l.b16 %v1454
      %v1958 = vunpack.c.l.b16 %v1455
      %v1959 = vunpack.c.l.b16 %v1456
      %v1960 = vunpack.c.l.b16 %v1457
      %v1961 = vpack.c.b16 %v1914, %v1913
      %v1962 = vpack.c.b16 %v1916, %v1915
      %v1963 = vpack.c.b16 %v1918, %v1917
      %v1964 = vpack.c.b16 %v1920, %v1919
      %v1965 = vpack.c.b16 %v1922, %v1921
      %v1966 = vpack.c.b16 %v1924, %v1923
      %v1967 = vpack.c.b16 %v1926, %v1925
      %v1968 = vpack.c.b16 %v1928, %v1927
      %v1969 = vpack.c.b16 %v1930, %v1929
      %v1970 = vpack.c.b16 %v1932, %v1931
      %v1971 = vpack.c.b16 %v1934, %v1933
      %v1972 = vpack.c.b16 %v1936, %v1935
      %v1973 = vpack.c.b16 %v1938, %v1937
      %v1974 = vpack.c.b16 %v1940, %v1939
      %v1975 = vpack.c.b16 %v1942, %v1941
      %v1976 = vpack.c.b16 %v1944, %v1943
      %v1977 = vpack.c.b16 %v1946, %v1945
      %v1978 = vpack.c.b16 %v1948, %v1947
      %v1979 = vpack.c.b16 %v1950, %v1949
      %v1980 = vpack.c.b16 %v1952, %v1951
      %v1981 = vpack.c.b16 %v1954, %v1953
      %v1982 = vpack.c.b16 %v1956, %v1955
      %v1983 = vpack.c.b16 %v1958, %v1957
      %v1984 = vpack.c.b16 %v1960, %v1959
      %2009 = vmatprep.subr.bf16.mxu0 0
      %2010 = vmatpush1.bf16.msra.mxu0 %v1968
      %2011 = vmatprep.subr.bf16.mxu0 0
      %2012 = vmatpush1.bf16.msra.mxu0 %v1967
      %2013 = vmatprep.subr.bf16.mxu0 0
      %2014 = vmatpush1.bf16.msra.mxu0 %v1966
      %2015 = vmatprep.subr.bf16.mxu0 0
      %2016 = vmatpush1.bf16.msra.mxu0 %v1965
      %2017 = vmatprep.subr.bf16.mxu0 0
      %2018 = vmatpush1.bf16.msra.mxu0 %v1964
      %2019 = vmatprep.subr.bf16.mxu0 0
      %2020 = vmatpush1.bf16.msra.mxu0 %v1963
      %2021 = vmatprep.subr.bf16.mxu0 0
      %2022 = vmatpush1.bf16.msra.mxu0 %v1962
      %2023 = vmatprep.subr.bf16.mxu0 0
      %2024 = vmatpush1.bf16.msra.mxu0 %v1961
      %2025 = vmatprep.subr.bf16.mxu0 0
      %2026 = vmatpush2.bf16.msra.mxu0 %v1976
      %2027 = vmatprep.subr.bf16.mxu0 0
      %2028 = vmatpush2.bf16.msra.mxu0 %v1975
      %2029 = vmatprep.subr.bf16.mxu0 0
      %2030 = vmatpush2.bf16.msra.mxu0 %v1974
      %2031 = vmatprep.subr.bf16.mxu0 0
      %2032 = vmatpush2.bf16.msra.mxu0 %v1973
      %2033 = vmatprep.subr.bf16.mxu0 0
      %2034 = vmatpush2.bf16.msra.mxu0 %v1972
      %2035 = vmatprep.subr.bf16.mxu0 0
      %2036 = vmatpush2.bf16.msra.mxu0 %v1971
      %2037 = vmatprep.subr.bf16.mxu0 0
      %2038 = vmatpush2.bf16.msra.mxu0 %v1970
      %2039 = vmatprep.subr.bf16.mxu0 0
      %2040 = vmatpush2.bf16.msra.mxu0 %v1969
      %2041 = vmatprep.mubr.bf16.mxu0 %v1842
      %2042 = vmatmul.mubr.bf16.gmra.mxu0 %v1841
      %v2043 = vpop.f32.mrf.mxu0
      %v2044 = vadd.f32 %v1808, %v2043
      %v2045 = vpop.f32.mrf.mxu0
      %v2046 = vpop.f32.mrf.mxu0
      %v2047 = vadd.f32 %v1811, %v2046
      %v2048 = vpop.f32.mrf.mxu0
      %2049 = vmatprep.mubr.bf16.mxu0 %v1845
      %2050 = vmatmul.mubr.bf16.gmra.mxu0 %v1844
      %v2051 = vpop.f32.mrf.mxu0
      %v2052 = vadd.f32 %v1816, %v2051
      %v2053 = vpop.f32.mrf.mxu0
      %v2054 = vpop.f32.mrf.mxu0
      %v2055 = vadd.f32 %v1819, %v2054
      %v2056 = vpop.f32.mrf.mxu0
      %2057 = vmatprep.mubr.bf16.mxu0 %v1848
      %2058 = vmatmul.mubr.bf16.gmra.mxu0 %v1847
      %v2059 = vpop.f32.mrf.mxu0
      %v2060 = vadd.f32 %v1824, %v2059
      %v2061 = vpop.f32.mrf.mxu0
      %v2062 = vpop.f32.mrf.mxu0
      %v2063 = vadd.f32 %v1827, %v2062
      %v2064 = vpop.f32.mrf.mxu0
      %2065 = vmatprep.mubr.bf16.mxu0 %v1851
      %2066 = vmatmul.mubr.bf16.gmra.mxu0 %v1850
      %v2067 = vpop.f32.mrf.mxu0
      %v2068 = vadd.f32 %v1832, %v2067
      %v2069 = vpop.f32.mrf.mxu0
      %v2070 = vpop.f32.mrf.mxu0
      %v2071 = vadd.f32 %v1835, %v2070
      %v2072 = vpop.f32.mrf.mxu0
      %2073 = vdwg.mxu0
      %2074 = vmatprep.subr.bf16.mxu0 0
      %2075 = vmatpush1.bf16.msra.mxu0 %v1984
      %2076 = vmatprep.subr.bf16.mxu0 0
      %2077 = vmatpush1.bf16.msra.mxu0 %v1983
      %2078 = vmatprep.subr.bf16.mxu0 0
      %2079 = vmatpush1.bf16.msra.mxu0 %v1982
      %2080 = vmatprep.subr.bf16.mxu0 0
      %2081 = vmatpush1.bf16.msra.mxu0 %v1981
      %2082 = vmatprep.subr.bf16.mxu0 0
      %2083 = vmatpush1.bf16.msra.mxu0 %v1980
      %2084 = vmatprep.subr.bf16.mxu0 0
      %2085 = vmatpush1.bf16.msra.mxu0 %v1979
      %2086 = vmatprep.subr.bf16.mxu0 0
      %2087 = vmatpush1.bf16.msra.mxu0 %v1978
      %2088 = vmatprep.subr.bf16.mxu0 0
      %2089 = vmatpush1.bf16.msra.mxu0 %v1977
      %2090 = vmatprep.subr.bf16.mxu0 0
      %2091 = vmatpush2.bf16.msra.mxu0 0
      %2092 = vmatprep.subr.bf16.mxu0 0
      %2093 = vmatpush2.bf16.msra.mxu0 0
      %2094 = vmatprep.subr.bf16.mxu0 0
      %2095 = vmatpush2.bf16.msra.mxu0 0
      %2096 = vmatprep.subr.bf16.mxu0 0
      %2097 = vmatpush2.bf16.msra.mxu0 0
      %2098 = vmatprep.subr.bf16.mxu0 0
      %2099 = vmatpush2.bf16.msra.mxu0 0
      %2100 = vmatprep.subr.bf16.mxu0 0
      %2101 = vmatpush2.bf16.msra.mxu0 0
      %2102 = vmatprep.subr.bf16.mxu0 0
      %2103 = vmatpush2.bf16.msra.mxu0 0
      %2104 = vmatprep.subr.bf16.mxu0 0
      %2105 = vmatpush2.bf16.msra.mxu0 0
      %2106 = vmatprep.mubr.bf16.mxu0 0
      %2107 = vmatmul.mubr.bf16.gmra.mxu0 %v1843
      %v2108 = vpop.f32.mrf.mxu0
      %v2109 = vadd.f32 %v2044, %v2108
      %v2110 = vpop.f32.mrf.mxu0
      %v2111 = vpop.f32.mrf.mxu0
      %v2112 = vadd.f32 %v2047, %v2111
      %v2113 = vpop.f32.mrf.mxu0
      %2114 = vmatprep.mubr.bf16.mxu0 0
      %2115 = vmatmul.mubr.bf16.gmra.mxu0 %v1846
      %v2116 = vpop.f32.mrf.mxu0
      %v2117 = vadd.f32 %v2052, %v2116
      %v2118 = vpop.f32.mrf.mxu0
      %v2119 = vpop.f32.mrf.mxu0
      %v2120 = vadd.f32 %v2055, %v2119
      %v2121 = vpop.f32.mrf.mxu0
      %2122 = vmatprep.mubr.bf16.mxu0 0
      %2123 = vmatmul.mubr.bf16.gmra.mxu0 %v1849
      %v2124 = vpop.f32.mrf.mxu0
      %v2125 = vadd.f32 %v2060, %v2124
      %v2126 = vpop.f32.mrf.mxu0
      %v2127 = vpop.f32.mrf.mxu0
      %v2128 = vadd.f32 %v2063, %v2127
      %v2129 = vpop.f32.mrf.mxu0
      %2130 = vmatprep.mubr.bf16.mxu0 0
      %2131 = vmatmul.mubr.bf16.gmra.mxu0 %v1852
      %v2132 = vpop.f32.mrf.mxu0
      %v2133 = vadd.f32 %v2068, %v2132
      %v2134 = vpop.f32.mrf.mxu0
      %v2135 = vpop.f32.mrf.mxu0
      %v2136 = vadd.f32 %v2071, %v2135
      %v2137 = vpop.f32.mrf.mxu0
      %2138 = vdwg.mxu0
      %v2140 = vshrl.u32 %v1337, 16
      %v2142 = vshll.u32 %v1337, 16
      %v2144 = vrot.slane %v2142, 1
      %v2145 = vor.u32 %v2140, %v2144
      %v2147 = vrot.slane %v1337, 1
      %s2148 = scalar_lea.vmem %s4, 384
      %v2149 = vld [vmem:[%s2148] sm:$0xf]
      %v2150 = vld [vmem:[%s2148 + $0x4] sm:$0xf]
      %v2151 = vld [vmem:[%s2148 + $0x8] sm:$0xf]
      %v2152 = vld [vmem:[%s2148 + $0xc] sm:$0xf]
      %v2153 = vld [vmem:[%s2148 + $0x10] sm:$0xf]
      %v2154 = vld [vmem:[%s2148 + $0x14] sm:$0xf]
      %v2155 = vld [vmem:[%s2148 + $0x18] sm:$0xf]
      %v2156 = vld [vmem:[%s2148 + $0x1c] sm:$0xf]
      %v2157 = vld [vmem:[%s2148 + $0x20] sm:$0xf]
      %v2158 = vld [vmem:[%s2148 + $0x24] sm:$0xf]
      %v2159 = vld [vmem:[%s2148 + $0x28] sm:$0xf]
      %v2160 = vld [vmem:[%s2148 + $0x2c] sm:$0xf]
      %v2161 = vld [vmem:[%s2148 + $0x30] sm:$0xf]
      %v2162 = vld [vmem:[%s2148 + $0x34] sm:$0xf]
      %v2163 = vld [vmem:[%s2148 + $0x38] sm:$0xf]
      %v2164 = vld [vmem:[%s2148 + $0x3c] sm:$0xf]
      %v2165 = vld [vmem:[%s2148 + $0x40] sm:$0xf]
      %v2166 = vld [vmem:[%s2148 + $0x44] sm:$0xf]
      %v2167 = vld [vmem:[%s2148 + $0x48] sm:$0xf]
      %v2168 = vld [vmem:[%s2148 + $0x4c] sm:$0xf]
      %v2169 = vld [vmem:[%s2148 + $0x50] sm:$0xf]
      %v2170 = vld [vmem:[%s2148 + $0x54] sm:$0xf]
      %v2171 = vld [vmem:[%s2148 + $0x58] sm:$0xf]
      %v2172 = vld [vmem:[%s2148 + $0x5c] sm:$0xf]
      %v2173 = vld [vmem:[%s2148 + $0x60] sm:$0xf]
      %v2174 = vld [vmem:[%s2148 + $0x64] sm:$0xf]
      %v2175 = vld [vmem:[%s2148 + $0x68] sm:$0xf]
      %v2176 = vld [vmem:[%s2148 + $0x6c] sm:$0xf]
      %v2177 = vld [vmem:[%s2148 + $0x70] sm:$0xf]
      %v2178 = vld [vmem:[%s2148 + $0x74] sm:$0xf]
      %v2179 = vld [vmem:[%s2148 + $0x78] sm:$0xf]
      %v2180 = vld [vmem:[%s2148 + $0x7c] sm:$0xf]
      %v2181 = vld [vmem:[%s2148 + $0x80] sm:$0xf]
      %v2182 = vld [vmem:[%s2148 + $0x84] sm:$0xf]
      %v2183 = vld [vmem:[%s2148 + $0x88] sm:$0xf]
      %v2184 = vld [vmem:[%s2148 + $0x8c] sm:$0xf]
      %v2185 = vld [vmem:[%s2148 + $0x90] sm:$0xf]
      %v2186 = vld [vmem:[%s2148 + $0x94] sm:$0xf]
      %v2187 = vld [vmem:[%s2148 + $0x98] sm:$0xf]
      %v2188 = vld [vmem:[%s2148 + $0x9c] sm:$0xf]
      %v2189 = vld [vmem:[%s2148 + $0xa0] sm:$0xf]
      %v2190 = vld [vmem:[%s2148 + $0xa4] sm:$0xf]
      %v2191 = vld [vmem:[%s2148 + $0xa8] sm:$0xf]
      %v2192 = vld [vmem:[%s2148 + $0xac] sm:$0xf]
      %v2193 = vld [vmem:[%s2148 + $0xb0] sm:$0xf]
      %v2194 = vld [vmem:[%s2148 + $0xb4] sm:$0xf]
      %v2195 = vld [vmem:[%s2148 + $0xb8] sm:$0xf]
      %v2196 = vld [vmem:[%s2148 + $0xbc] sm:$0xf]
      %v2197 = vunpack.c.l.b16 %v1337
      %v2198 = vunpack.c.l.b16 %v2145
      %v2199 = vunpack.c.l.b16 %v2147
      %v2200 = vpack.c.b16 %v2197, %v1537
      %v2201 = vpack.c.b16 %v2198, %v1538
      %v2202 = vpack.c.b16 %v2199, %v1539
      %v2254 = vunpack.c.l.b16 %v2149
      %v2255 = vunpack.c.l.b16 %v2150
      %v2256 = vunpack.c.l.b16 %v2151
      %v2257 = vunpack.c.l.b16 %v2152
      %v2258 = vunpack.c.l.b16 %v2153
      %v2259 = vunpack.c.l.b16 %v2154
      %v2260 = vunpack.c.l.b16 %v2155
      %v2261 = vunpack.c.l.b16 %v2156
      %v2262 = vunpack.c.l.b16 %v2157
      %v2263 = vunpack.c.l.b16 %v2158
      %v2264 = vunpack.c.l.b16 %v2159
      %v2265 = vunpack.c.l.b16 %v2160
      %v2266 = vunpack.c.l.b16 %v2161
      %v2267 = vunpack.c.l.b16 %v2162
      %v2268 = vunpack.c.l.b16 %v2163
      %v2269 = vunpack.c.l.b16 %v2164
      %v2270 = vunpack.c.l.b16 %v2165
      %v2271 = vunpack.c.l.b16 %v2166
      %v2272 = vunpack.c.l.b16 %v2167
      %v2273 = vunpack.c.l.b16 %v2168
      %v2274 = vunpack.c.l.b16 %v2169
      %v2275 = vunpack.c.l.b16 %v2170
      %v2276 = vunpack.c.l.b16 %v2171
      %v2277 = vunpack.c.l.b16 %v2172
      %v2278 = vunpack.c.l.b16 %v2173
      %v2279 = vunpack.c.l.b16 %v2174
      %v2280 = vunpack.c.l.b16 %v2175
      %v2281 = vunpack.c.l.b16 %v2176
      %v2282 = vunpack.c.l.b16 %v2177
      %v2283 = vunpack.c.l.b16 %v2178
      %v2284 = vunpack.c.l.b16 %v2179
      %v2285 = vunpack.c.l.b16 %v2180
      %v2286 = vunpack.c.l.b16 %v2181
      %v2287 = vunpack.c.l.b16 %v2182
      %v2288 = vunpack.c.l.b16 %v2183
      %v2289 = vunpack.c.l.b16 %v2184
      %v2290 = vunpack.c.l.b16 %v2185
      %v2291 = vunpack.c.l.b16 %v2186
      %v2292 = vunpack.c.l.b16 %v2187
      %v2293 = vunpack.c.l.b16 %v2188
      %v2294 = vunpack.c.l.b16 %v2189
      %v2295 = vunpack.c.l.b16 %v2190
      %v2296 = vunpack.c.l.b16 %v2191
      %v2297 = vunpack.c.l.b16 %v2192
      %v2298 = vunpack.c.l.b16 %v2193
      %v2299 = vunpack.c.l.b16 %v2194
      %v2300 = vunpack.c.l.b16 %v2195
      %v2301 = vunpack.c.l.b16 %v2196
      %v2302 = vpack.c.b16 %v2255, %v2254
      %v2303 = vpack.c.b16 %v2257, %v2256
      %v2304 = vpack.c.b16 %v2259, %v2258
      %v2305 = vpack.c.b16 %v2261, %v2260
      %v2306 = vpack.c.b16 %v2263, %v2262
      %v2307 = vpack.c.b16 %v2265, %v2264
      %v2308 = vpack.c.b16 %v2267, %v2266
      %v2309 = vpack.c.b16 %v2269, %v2268
      %v2310 = vpack.c.b16 %v2271, %v2270
      %v2311 = vpack.c.b16 %v2273, %v2272
      %v2312 = vpack.c.b16 %v2275, %v2274
      %v2313 = vpack.c.b16 %v2277, %v2276
      %v2314 = vpack.c.b16 %v2279, %v2278
      %v2315 = vpack.c.b16 %v2281, %v2280
      %v2316 = vpack.c.b16 %v2283, %v2282
      %v2317 = vpack.c.b16 %v2285, %v2284
      %v2318 = vpack.c.b16 %v2287, %v2286
      %v2319 = vpack.c.b16 %v2289, %v2288
      %v2320 = vpack.c.b16 %v2291, %v2290
      %v2321 = vpack.c.b16 %v2293, %v2292
      %v2322 = vpack.c.b16 %v2295, %v2294
      %v2323 = vpack.c.b16 %v2297, %v2296
      %v2324 = vpack.c.b16 %v2299, %v2298
      %v2325 = vpack.c.b16 %v2301, %v2300
      %2350 = vmatprep.subr.bf16.mxu0 0
      %2351 = vmatpush1.bf16.msra.mxu0 %v2309
      %2352 = vmatprep.subr.bf16.mxu0 0
      %2353 = vmatpush1.bf16.msra.mxu0 %v2308
      %2354 = vmatprep.subr.bf16.mxu0 0
      %2355 = vmatpush1.bf16.msra.mxu0 %v2307
      %2356 = vmatprep.subr.bf16.mxu0 0
      %2357 = vmatpush1.bf16.msra.mxu0 %v2306
      %2358 = vmatprep.subr.bf16.mxu0 0
      %2359 = vmatpush1.bf16.msra.mxu0 %v2305
      %2360 = vmatprep.subr.bf16.mxu0 0
      %2361 = vmatpush1.bf16.msra.mxu0 %v2304
      %2362 = vmatprep.subr.bf16.mxu0 0
      %2363 = vmatpush1.bf16.msra.mxu0 %v2303
      %2364 = vmatprep.subr.bf16.mxu0 0
      %2365 = vmatpush1.bf16.msra.mxu0 %v2302
      %2366 = vmatprep.subr.bf16.mxu0 0
      %2367 = vmatpush2.bf16.msra.mxu0 %v2317
      %2368 = vmatprep.subr.bf16.mxu0 0
      %2369 = vmatpush2.bf16.msra.mxu0 %v2316
      %2370 = vmatprep.subr.bf16.mxu0 0
      %2371 = vmatpush2.bf16.msra.mxu0 %v2315
      %2372 = vmatprep.subr.bf16.mxu0 0
      %2373 = vmatpush2.bf16.msra.mxu0 %v2314
      %2374 = vmatprep.subr.bf16.mxu0 0
      %2375 = vmatpush2.bf16.msra.mxu0 %v2313
      %2376 = vmatprep.subr.bf16.mxu0 0
      %2377 = vmatpush2.bf16.msra.mxu0 %v2312
      %2378 = vmatprep.subr.bf16.mxu0 0
      %2379 = vmatpush2.bf16.msra.mxu0 %v2311
      %2380 = vmatprep.subr.bf16.mxu0 0
      %2381 = vmatpush2.bf16.msra.mxu0 %v2310
      %2382 = vmatprep.mubr.bf16.mxu0 %v1845
      %2383 = vmatmul.mubr.bf16.gmra.mxu0 %v1844
      %v2384 = vpop.f32.mrf.mxu0
      %v2385 = vadd.f32 0.0, %v2384
      %v2386 = vpop.f32.mrf.mxu0
      %v2387 = vpop.f32.mrf.mxu0
      %v2388 = vadd.f32 0.0, %v2387
      %v2389 = vpop.f32.mrf.mxu0
      %2390 = vmatprep.mubr.bf16.mxu0 %v1848
      %2391 = vmatmul.mubr.bf16.gmra.mxu0 %v1847
      %v2392 = vpop.f32.mrf.mxu0
      %v2393 = vadd.f32 0.0, %v2392
      %v2394 = vpop.f32.mrf.mxu0
      %v2395 = vpop.f32.mrf.mxu0
      %v2396 = vadd.f32 0.0, %v2395
      %v2397 = vpop.f32.mrf.mxu0
      %2398 = vmatprep.mubr.bf16.mxu0 %v1851
      %2399 = vmatmul.mubr.bf16.gmra.mxu0 %v1850
      %v2400 = vpop.f32.mrf.mxu0
      %v2401 = vadd.f32 0.0, %v2400
      %v2402 = vpop.f32.mrf.mxu0
      %v2403 = vpop.f32.mrf.mxu0
      %v2404 = vadd.f32 0.0, %v2403
      %v2405 = vpop.f32.mrf.mxu0
      %2406 = vmatprep.mubr.bf16.mxu0 %v2201
      %2407 = vmatmul.mubr.bf16.gmra.mxu0 %v2200
      %v2408 = vpop.f32.mrf.mxu0
      %v2409 = vadd.f32 0.0, %v2408
      %v2410 = vpop.f32.mrf.mxu0
      %v2411 = vpop.f32.mrf.mxu0
      %v2412 = vadd.f32 0.0, %v2411
      %v2413 = vpop.f32.mrf.mxu0
      %2414 = vdwg.mxu0
      %2415 = vmatprep.subr.bf16.mxu0 0
      %2416 = vmatpush1.bf16.msra.mxu0 %v2325
      %2417 = vmatprep.subr.bf16.mxu0 0
      %2418 = vmatpush1.bf16.msra.mxu0 %v2324
      %2419 = vmatprep.subr.bf16.mxu0 0
      %2420 = vmatpush1.bf16.msra.mxu0 %v2323
      %2421 = vmatprep.subr.bf16.mxu0 0
      %2422 = vmatpush1.bf16.msra.mxu0 %v2322
      %2423 = vmatprep.subr.bf16.mxu0 0
      %2424 = vmatpush1.bf16.msra.mxu0 %v2321
      %2425 = vmatprep.subr.bf16.mxu0 0
      %2426 = vmatpush1.bf16.msra.mxu0 %v2320
      %2427 = vmatprep.subr.bf16.mxu0 0
      %2428 = vmatpush1.bf16.msra.mxu0 %v2319
      %2429 = vmatprep.subr.bf16.mxu0 0
      %2430 = vmatpush1.bf16.msra.mxu0 %v2318
      %2431 = vmatprep.subr.bf16.mxu0 0
      %2432 = vmatpush2.bf16.msra.mxu0 0
      %2433 = vmatprep.subr.bf16.mxu0 0
      %2434 = vmatpush2.bf16.msra.mxu0 0
      %2435 = vmatprep.subr.bf16.mxu0 0
      %2436 = vmatpush2.bf16.msra.mxu0 0
      %2437 = vmatprep.subr.bf16.mxu0 0
      %2438 = vmatpush2.bf16.msra.mxu0 0
      %2439 = vmatprep.subr.bf16.mxu0 0
      %2440 = vmatpush2.bf16.msra.mxu0 0
      %2441 = vmatprep.subr.bf16.mxu0 0
      %2442 = vmatpush2.bf16.msra.mxu0 0
      %2443 = vmatprep.subr.bf16.mxu0 0
      %2444 = vmatpush2.bf16.msra.mxu0 0
      %2445 = vmatprep.subr.bf16.mxu0 0
      %2446 = vmatpush2.bf16.msra.mxu0 0
      %2447 = vmatprep.mubr.bf16.mxu0 0
      %2448 = vmatmul.mubr.bf16.gmra.mxu0 %v1846
      %v2449 = vpop.f32.mrf.mxu0
      %v2450 = vadd.f32 %v2385, %v2449
      %v2451 = vpop.f32.mrf.mxu0
      %v2452 = vpop.f32.mrf.mxu0
      %v2453 = vadd.f32 %v2388, %v2452
      %v2454 = vpop.f32.mrf.mxu0
      %2455 = vmatprep.mubr.bf16.mxu0 0
      %2456 = vmatmul.mubr.bf16.gmra.mxu0 %v1849
      %v2457 = vpop.f32.mrf.mxu0
      %v2458 = vadd.f32 %v2393, %v2457
      %v2459 = vpop.f32.mrf.mxu0
      %v2460 = vpop.f32.mrf.mxu0
      %v2461 = vadd.f32 %v2396, %v2460
      %v2462 = vpop.f32.mrf.mxu0
      %2463 = vmatprep.mubr.bf16.mxu0 0
      %2464 = vmatmul.mubr.bf16.gmra.mxu0 %v1852
      %v2465 = vpop.f32.mrf.mxu0
      %v2466 = vadd.f32 %v2401, %v2465
      %v2467 = vpop.f32.mrf.mxu0
      %v2468 = vpop.f32.mrf.mxu0
      %v2469 = vadd.f32 %v2404, %v2468
      %v2470 = vpop.f32.mrf.mxu0
      %2471 = vmatprep.mubr.bf16.mxu0 0
      %2472 = vmatmul.mubr.bf16.gmra.mxu0 %v2202
      %v2473 = vpop.f32.mrf.mxu0
      %v2474 = vadd.f32 %v2409, %v2473
      %v2475 = vpop.f32.mrf.mxu0
      %v2476 = vpop.f32.mrf.mxu0
      %v2477 = vadd.f32 %v2412, %v2476
      %v2478 = vpop.f32.mrf.mxu0
      %2479 = vdwg.mxu0
      %v2480 = vadd.f32 %v2109, %v2450
      %v2481 = vadd.f32 %v2112, %v2453
      %v2482 = vadd.f32 %v2117, %v2458
      %v2483 = vadd.f32 %v2120, %v2461
      %v2484 = vadd.f32 %v2125, %v2466
      %v2485 = vadd.f32 %v2128, %v2469
      %v2486 = vadd.f32 %v2133, %v2474
      %v2487 = vadd.f32 %v2136, %v2477
      %v2488 = vld [vmem:[%s5] sm:$0x1]
      %v2490 = vlaneseq
      %v2491 = vshrl.u32 %v2490, 7
      %v2492 = vsub.s32 0, %v2491
      %v2493 = vrot.slane %v2488, %v2492
      %v2495 = vmul.f32 %v2480, %v2493
      %v2496 = vmul.f32 %v2481, %v2493
      %v2497 = vmul.f32 %v2482, %v2493
      %v2498 = vmul.f32 %v2483, %v2493
      %v2499 = vmul.f32 %v2484, %v2493
      %v2500 = vmul.f32 %v2485, %v2493
      %v2501 = vmul.f32 %v2486, %v2493
      %v2502 = vmul.f32 %v2487, %v2493
      %v2503 = vld [vmem:[%s6] sm:$0x1]
      %v2505 = vlaneseq
      %v2506 = vshrl.u32 %v2505, 7
      %v2507 = vsub.s32 0, %v2506
      %v2508 = vrot.slane %v2503, %v2507
      %v2510 = vadd.f32 %v2495, %v2508
      %v2511 = vadd.f32 %v2496, %v2508
      %v2512 = vadd.f32 %v2497, %v2508
      %v2513 = vadd.f32 %v2498, %v2508
      %v2514 = vadd.f32 %v2499, %v2508
      %v2515 = vadd.f32 %v2500, %v2508
      %v2516 = vadd.f32 %v2501, %v2508
      %v2517 = vadd.f32 %v2502, %v2508
      %v2518 = vmax.f32 %v2510, 0.0
      %v2519 = vmax.f32 %v2511, 0.0
      %v2520 = vmax.f32 %v2512, 0.0
      %v2521 = vmax.f32 %v2513, 0.0
      %v2522 = vmax.f32 %v2514, 0.0
      %v2523 = vmax.f32 %v2515, 0.0
      %v2524 = vmax.f32 %v2516, 0.0
      %v2525 = vmax.f32 %v2517, 0.0
      %2526 = vst [vmem:[%s314] sm:$0xff] %v2518
      %2527 = vst [vmem:[%s314 + $0x8] sm:$0xff] %v2519
      %2528 = vst [vmem:[%s314 + $0x10] sm:$0xff] %v2520
      %2529 = vst [vmem:[%s314 + $0x18] sm:$0xff] %v2521
      %2530 = vst [vmem:[%s314 + $0x20] sm:$0xff] %v2522
      %2531 = vst [vmem:[%s314 + $0x28] sm:$0xff] %v2523
      %2532 = vst [vmem:[%s314 + $0x30] sm:$0xff] %v2524
      %2533 = vst [vmem:[%s314 + $0x38] sm:$0xff] %v2525
      %s2534 = smul.u32 8, %s23
      %p2535 = scmp.lt.s32.totalorder %s22, 1
      %s2536 = scalar_select %p2535, %s22, 1
      %p2537 = scmp.lt.s32.totalorder %s2534, 7
      %s2538 = scalar_select %p2537, %s2534, 7
      %s2539 = smul.addr %s2536, 8
      %s2540 = sadd.s32 %s2538, %s2539
      %s2541 = smul.addr %s2540, 8
      %s2542 = scalar_lea.vmem %s7, %s2541
      // Predicated region
      $region49: #{down_pallas.1} parent=47 // pred_check
        %p2543 = pneg %p204
      $region50: #{down_pallas.1} parent=47 // pred_check_branch
        %2545 = sbr.rel (%p2543) target = $region52
      $region51: #{down_pallas.1} parent=47 // pred_region
        %s2546 = smul.u32 8, %s23
      $region52: #{down_pallas.1} parent=47 // pred_fallthru
        _
    $region48: #{down_pallas.1} parent=5 // pred_fallthru
      _
    %p2547 = scmp.le.s32.totalorder 2, %s13
    // Predicated region
    $region53: #{down_pallas.1} parent=5 // pred_check
      %p2548 = pneg %p2547
    $region54: #{down_pallas.1} parent=5 // pred_check_branch
      %2550 = sbr.rel (%p2548) target = $region56
    $region55: #{down_pallas.1} parent=5 // pred_region
      %s2551 = ssub.s32 %s13, 2
      // Predicated region
      $region57: #{down_pallas.1} parent=55 // pred_check
        %p2552 = pneg %p210
      $region58: #{down_pallas.1} parent=55 // pred_check_branch
        %2554 = sbr.rel (%p2552) target = $region60
      $region59: #{down_pallas.1} parent=55 // pred_region
        %s2555 = smul.u32 8, %s25
        %p2556 = scmp.lt.s32.totalorder %s24, 1
        %s2557 = scalar_select %p2556, %s24, 1
        %p2558 = scmp.lt.s32.totalorder %s2555, 7
        %s2559 = scalar_select %p2558, %s2555, 7
        %s2560 = smul.addr %s2557, 8
        %s2561 = sadd.s32 %s2559, %s2560
        %s2562 = smul.addr %s2561, 8
        %s2563 = scalar_lea.vmem %s7, %s2562
      $region60: #{down_pallas.1} parent=55 // pred_fallthru
        _
    $region56: #{down_pallas.1} parent=5 // pred_fallthru
      _
  $region6: #{down_pallas.1} parent=0 // loop_footer
    %s17 = sadd.s32 1, %s13
  $region7: #{down_pallas.1} parent=0 // loop_footer_branch
    %12 = sbr.rel target = $region3
  $region8: #{down_pallas.1} parent=0 // loop_exit
    _

</llo_original>
